<compile_context>
chip_gen: v7x
topology: tpu7x:2x2x1
jax: 0.10.0
libtpu: 0.0.40
codegen_flags: <defaults>
</compile_context>

<pallas_src>
import functools

import jax
import jax.numpy as jnp
from jax.experimental import pallas as pl
from jax.experimental.pallas import tpu as pltpu


# ----------------------------------------------------------------------------
# Fused kernel: pupil chain * z-div -> cropped DFT -> p-div intensity -> a*x+b
# ----------------------------------------------------------------------------
def _fused_psf_kernel(src_re_ref, src_im_ref,     # (2N, zb*N)   src tiled over z lanes
                      win_re_ref, win_im_ref,     # (N_win, 2N, zb*N)
                      zd_re_ref, zd_im_ref,       # (1, 2N, zb*N)  this step's z-planes
                      f2_re_ref, f2_im_ref,       # (2Nd, 2N)    blkdiag(F, F)
                      rb_re_ref, rb_im_ref,       # (zb*N, L)    blkdiag_z(F^T)/N tiled x Np
                      jw_re_ref, jw_im_ref,       # (2, 2, 1, L) lane-broadcast Jones coeffs
                      amp_ref, bck_ref,           # (1, Nd, L)   photobleach a / background b
                      out_ref,                    # (1, Nd, L)
                      *, n_win, n_data, scale_sqrt):
    f32 = jnp.float32

    # ---- window / aberration pupil product (lane-dense; tiled over z,c) -----
    wr = win_re_ref[0]
    wi = win_im_ref[0]
    for k in range(1, n_win):
        ar = win_re_ref[k]
        ai = win_im_ref[k]
        wr, wi = wr * ar - wi * ai, wr * ai + wi * ar

    # ---- combined pupil: sqrt(scale) * src * prod(wins) ----------------------
    sr = src_re_ref[...] * scale_sqrt
    si = src_im_ref[...] * scale_sqrt
    cr = sr * wr - si * wi
    ci = sr * wi + si * wr

    # ---- z-diversity ----------------------------------------------------------
    zr = zd_re_ref[0]
    zi = zd_im_ref[0]
    xr = cr * zr - ci * zi            # rows = (c, n), lanes = (z, m)
    xi = cr * zi + ci * zr

    def mm(a, bmat):
        return jnp.dot(a, bmat, preferred_element_type=f32)

    # ---- cropped/shifted DFT along rows:  T = blkdiag(F, F) @ X --------------
    f2r = f2_re_ref[...]
    f2i = f2_im_ref[...]
    tr = mm(f2r, xr) - mm(f2i, xi)    # (2Nd, zb*N)
    ti = mm(f2r, xi) + mm(f2i, xr)

    # ---- DFT along cols + crop + 1/N + replicate across p (one matmul) -------
    rbr = rb_re_ref[...]
    rbi = rb_im_ref[...]
    yr = mm(tr, rbr) - mm(ti, rbi)    # (2Nd, L); lanes = (p, z, v)
    yi = mm(tr, rbi) + mm(ti, rbr)

    # split the two Jones components: clean sublane-group row slices, no relayout
    y0r, y1r = yr[:n_data], yr[n_data:]
    y0i, y1i = yi[:n_data], yi[n_data:]

    # ---- p-diversity (Jones 2x2) + intensity, all lane-dense ------------------
    acc = jnp.zeros_like(y0r)
    for i in range(2):                       # output Jones component
        jr0 = jw_re_ref[i, 0]                # (1, L) lane-broadcast coefficients
        ji0 = jw_im_ref[i, 0]
        jr1 = jw_re_ref[i, 1]
        ji1 = jw_im_ref[i, 1]
        er = jr0 * y0r - ji0 * y0i + jr1 * y1r - ji1 * y1i
        ei = jr0 * y0i + ji0 * y0r + jr1 * y1i + ji1 * y1r
        acc = acc + er * er + ei * ei

    # ---- PhotoBleachBackground: a * I + b, single unmasked lane-dense store ---
    out_ref[0] = amp_ref[0] * acc + bck_ref[0]


def _pick_zb(n_zdiv, num_cores):
    """z-planes per grid step.

    Single-TensorCore chips (v5e/v6e) want exactly one grid step (per-step
    overhead ~600 cycles dwarfs the per-step compute here).  On v7x pass
    num_cores=2 to split the z-planes across both TensorCores; benchmark —
    at these sizes it may be a wash.
    """
    if num_cores <= 1:
        return n_zdiv
    for steps in range(min(num_cores, n_zdiv), 0, -1):
        if n_zdiv % steps == 0:
            return n_zdiv // steps
    return n_zdiv


# ----------------------------------------------------------------------------
# Wrapper: lane-dense pre-layout (pure layout plumbing) + pallas_call
# ----------------------------------------------------------------------------
def psf_stack_forward(src, wins, zdiv, jones, a, b, scale_factor, N_data,
                      num_cores=1):
    f32 = jnp.float32
    N_pts = src.shape[-1]
    if wins.shape[0] == 0:                       # no window/aberration pupils
        wins = jnp.ones((1, N_pts, N_pts), jnp.complex64)
    N_win = wins.shape[0]
    N_zdiv = zdiv.shape[0]
    N_pdiv = jones.shape[0]

    zb = _pick_zb(N_zdiv, num_cores)
    n_steps = N_zdiv // zb
    L = N_pdiv * zb * N_data                     # lane width of post-DFT tiles

    def reim(x):
        return jnp.real(x).astype(f32), jnp.imag(x).astype(f32)

    # ---- pupil-plane arrays, rows = (c, n), lanes = (z, m) --------------------
    src_re, src_im = reim(src.reshape(2 * N_pts, N_pts))
    src_re = jnp.tile(src_re, (1, zb))                       # (2N, zb*N)
    src_im = jnp.tile(src_im, (1, zb))

    win_re, win_im = reim(wins)
    win_re = jnp.tile(win_re, (1, 2, zb))                    # (N_win, 2N, zb*N)
    win_im = jnp.tile(win_im, (1, 2, zb))

    zd_re, zd_im = reim(zdiv)

    def widen_z(z):                                          # (Nz,N,N)->(steps,2N,zb*N)
        z = z.reshape(n_steps, zb, N_pts, N_pts)
        z = jnp.transpose(z, (0, 2, 1, 3)).reshape(n_steps, N_pts, zb * N_pts)
        return jnp.tile(z, (1, 2, 1))

    zd_re = widen_z(zd_re)
    zd_im = widen_z(zd_im)

    # ---- shifted + cropped DFT matrices ---------------------------------------
    #   F[u, n] = exp(-2*pi*i * (u - Nd/2) * n / N)  == crop_center(fftshift(fft2))
    u = jnp.arange(N_data, dtype=f32) - N_data // 2
    n = jnp.arange(N_pts, dtype=f32)
    phase = -2.0 * jnp.pi * u[:, None] * n[None, :] / N_pts
    f_re, f_im = jnp.cos(phase), jnp.sin(phase)              # (Nd, N)

    eye2 = jnp.eye(2, dtype=f32)
    f2_re = jnp.kron(eye2, f_re)                             # (2Nd, 2N)
    f2_im = jnp.kron(eye2, f_im)

    eyez = jnp.eye(zb, dtype=f32)
    inv_n = 1.0 / N_pts                                      # 1/N baked into RHS
    rb_re = jnp.tile(jnp.kron(eyez, f_re.T), (1, N_pdiv)) * inv_n   # (zb*N, L)
    rb_im = jnp.tile(jnp.kron(eyez, f_im.T), (1, N_pdiv)) * inv_n

    # ---- lane-broadcast Jones coefficients and a / b ---------------------------
    j_re = jnp.real(jones).astype(f32)                       # (Np, 2, 2)
    j_im = jnp.imag(jones).astype(f32)

    def widen_j(j):
        j = jnp.transpose(j, (1, 2, 0))                      # (2, 2, Np)  [i, c, p]
        j = jnp.repeat(j, zb * N_data, axis=-1)              # (2, 2, L)
        return j.reshape(2, 2, 1, L)

    jw_re = widen_j(j_re)
    jw_im = widen_j(j_im)

    def widen_ab(x):                                         # (Nz, Np) -> (steps, Nd, L)
        x = jnp.asarray(x, f32).reshape(n_steps, zb, N_pdiv)
        x = jnp.transpose(x, (0, 2, 1)).reshape(n_steps, N_pdiv * zb)
        x = jnp.repeat(x, N_data, axis=-1)                   # (steps, L)
        return jnp.repeat(x[:, None, :], N_data, axis=1)

    amp = widen_ab(a)
    bck = widen_ab(b)

    kernel = functools.partial(_fused_psf_kernel, n_win=N_win, n_data=N_data,
                               scale_sqrt=float(scale_factor) ** 0.5)

    fixed2 = lambda g: (0, 0)
    fixed3 = lambda g: (0, 0, 0)
    fixed4 = lambda g: (0, 0, 0, 0)
    step3 = lambda g: (g, 0, 0)

    out_wide = pl.pallas_call(
        kernel,
        out_shape=jax.ShapeDtypeStruct((n_steps, N_data, L), f32),
        grid=(n_steps,),
        in_specs=[
            pl.BlockSpec((2 * N_pts, zb * N_pts), fixed2),            # src re
            pl.BlockSpec((2 * N_pts, zb * N_pts), fixed2),            # src im
            pl.BlockSpec((N_win, 2 * N_pts, zb * N_pts), fixed3),     # wins re
            pl.BlockSpec((N_win, 2 * N_pts, zb * N_pts), fixed3),     # wins im
            pl.BlockSpec((1, 2 * N_pts, zb * N_pts), step3),          # zdiv re
            pl.BlockSpec((1, 2 * N_pts, zb * N_pts), step3),          # zdiv im
            pl.BlockSpec((2 * N_data, 2 * N_pts), fixed2),            # F2 re
            pl.BlockSpec((2 * N_data, 2 * N_pts), fixed2),            # F2 im
            pl.BlockSpec((zb * N_pts, L), fixed2),                    # right DFT re
            pl.BlockSpec((zb * N_pts, L), fixed2),                    # right DFT im
            pl.BlockSpec((2, 2, 1, L), fixed4),                       # Jones re
            pl.BlockSpec((2, 2, 1, L), fixed4),                       # Jones im
            pl.BlockSpec((1, N_data, L), step3),                      # photobleach a
            pl.BlockSpec((1, N_data, L), step3),                      # background b
        ],
        out_specs=pl.BlockSpec((1, N_data, L), step3),
        compiler_params=pltpu.CompilerParams(
            dimension_semantics=("parallel",)),
    )(src_re, src_im, win_re, win_im, zd_re, zd_im, f2_re, f2_im,
      rb_re, rb_im, jw_re, jw_im, amp, bck)

    # lane index = p*zb*Nd + zz*Nd + v  ->  (N_data, N_data, N_zdiv, N_pdiv)
    out = out_wide.reshape(n_steps, N_data, N_pdiv, zb, N_data)
    out = jnp.transpose(out, (1, 4, 0, 3, 2))
    return out.reshape(N_data, N_data, N_zdiv, N_pdiv)


# ----------------------------------------------------------------------------
# Pure-JAX reference (mirrors the PyTorch forward literally)
# ----------------------------------------------------------------------------
def reference_forward(src, wins, zdiv, jones, a, b, scale_factor, N_pts, N_data):
    field = jnp.sqrt(scale_factor) * jnp.transpose(src, (1, 2, 0))[..., None]  # (H,W,2,1)
    for k in range(wins.shape[0]):
        field = field * wins[k][..., None, None]
    field = field[..., None, :, :] * jnp.transpose(zdiv, (1, 2, 0))[..., None, None]  # (H,W,Nz,2,1)
    out = jnp.fft.fftshift(jnp.fft.fft2(field, axes=(0, 1)), axes=(0, 1)) / N_pts
    c0 = N_pts // 2 - N_data // 2
    out = out[c0:c0 + N_data, c0:c0 + N_data]
    out = jnp.einsum('pij,hwzjk->hwzpik', jones, out)            # p-diversity
    inten = jnp.sum(jnp.abs(out) ** 2, axis=(-2, -1))            # torchNoBlurring
    return a * inten + b                                         # PhotoBleachBackground


if __name__ == "__main__":
    N_pts, N_data, N_zdiv, N_pdiv, N_win = 32, 16, 4, 4, 2

    key = jax.random.PRNGKey(0)
    ks = jax.random.split(key, 4)

    def crandn(k, shape):
        kr, ki = jax.random.split(k)
        return (jax.random.normal(kr, shape, jnp.float32)
                + 1j * jax.random.normal(ki, shape, jnp.float32)).astype(jnp.complex64)

    # synthetic, deterministic "pupil"/"diversity" arrays (the torchPupil /
    # torchZDiversity / torchPDiversity objects are not provided — we model
    # their outputs per the torchPSFstack conventions)
    src = crandn(ks[0], (2, N_pts, N_pts))          # pupils[0]() Jones field
    wins = crandn(ks[1], (N_win, N_pts, N_pts))     # pupils[1:] window/aberration arrays
    zdiv = crandn(ks[2], (N_zdiv, N_pts, N_pts))    # z-diversity phase factors
    jones = crandn(ks[3], (N_pdiv, 2, 2))           # p-diversity Jones matrices

    # PhotoBleachBackground deterministic init: b = b_est * ones(sh), a = ones(sh)
    b_est = 0.1
    a = jnp.ones((N_zdiv, N_pdiv), jnp.float32)
    b = b_est * jnp.ones((N_zdiv, N_pdiv), jnp.float32)
    scale_factor = 2.0

    out = psf_stack_forward(src, wins, zdiv, jones, a, b, scale_factor, N_data)
    out = jax.block_until_ready(out)

    ref = jax.block_until_ready(
        reference_forward(src, wins, zdiv, jones, a, b, scale_factor, N_pts, N_data))

    assert out.shape == (N_data, N_data, N_zdiv, N_pdiv), out.shape
    rel_err = float(jnp.max(jnp.abs(out - ref)) / (jnp.max(jnp.abs(ref)) + 1e-12))
    assert rel_err < 1e-3, f"mismatch vs reference, rel_err={rel_err}"

    print("KERNEL_OK")
</pallas_src>

<mosaic_0001>
module attributes {stable_mosaic.version = 11 : i64} {
  func.func @_fused_psf_kernel(%arg0: i32, %arg1: memref<64x128xf32, #tpu.memory_space<vmem>>, %arg2: memref<64x128xf32, #tpu.memory_space<vmem>>, %arg3: memref<2x64x128xf32, #tpu.memory_space<vmem>>, %arg4: memref<2x64x128xf32, #tpu.memory_space<vmem>>, %arg5: memref<1x64x128xf32, #tpu.memory_space<vmem>>, %arg6: memref<1x64x128xf32, #tpu.memory_space<vmem>>, %arg7: memref<32x64xf32, #tpu.memory_space<vmem>>, %arg8: memref<32x64xf32, #tpu.memory_space<vmem>>, %arg9: memref<128x256xf32, #tpu.memory_space<vmem>>, %arg10: memref<128x256xf32, #tpu.memory_space<vmem>>, %arg11: memref<2x2x1x256xf32, #tpu.memory_space<vmem>>, %arg12: memref<2x2x1x256xf32, #tpu.memory_space<vmem>>, %arg13: memref<1x16x256xf32, #tpu.memory_space<vmem>>, %arg14: memref<1x16x256xf32, #tpu.memory_space<vmem>>, %arg15: memref<1x16x256xf32, #tpu.memory_space<vmem>>) attributes {dimension_semantics = [#tpu.dimension_semantics<parallel>], iteration_bounds = array<i64: 1>, scalar_prefetch = 0 : i64, scratch_operands = 0 : i64, tpu.core_type = #tpu.core_type<tc>, window_params = [{pipeline_mode = #tpu.pipeline_mode<synchronous>, transform_indices = @transform_0, window_bounds = array<i64: 64, 128>}, {pipeline_mode = #tpu.pipeline_mode<synchronous>, transform_indices = @transform_1, window_bounds = array<i64: 64, 128>}, {pipeline_mode = #tpu.pipeline_mode<synchronous>, transform_indices = @transform_2, window_bounds = array<i64: 2, 64, 128>}, {pipeline_mode = #tpu.pipeline_mode<synchronous>, transform_indices = @transform_3, window_bounds = array<i64: 2, 64, 128>}, {transform_indices = @transform_4, window_bounds = array<i64: 1, 64, 128>}, {transform_indices = @transform_5, window_bounds = array<i64: 1, 64, 128>}, {pipeline_mode = #tpu.pipeline_mode<synchronous>, transform_indices = @transform_6, window_bounds = array<i64: 32, 64>}, {pipeline_mode = #tpu.pipeline_mode<synchronous>, transform_indices = @transform_7, window_bounds = array<i64: 32, 64>}, {pipeline_mode = #tpu.pipeline_mode<synchronous>, transform_indices = @transform_8, window_bounds = array<i64: 128, 256>}, {pipeline_mode = #tpu.pipeline_mode<synchronous>, transform_indices = @transform_9, window_bounds = array<i64: 128, 256>}, {pipeline_mode = #tpu.pipeline_mode<synchronous>, transform_indices = @transform_10, window_bounds = array<i64: 2, 2, 1, 256>}, {pipeline_mode = #tpu.pipeline_mode<synchronous>, transform_indices = @transform_11, window_bounds = array<i64: 2, 2, 1, 256>}, {transform_indices = @transform_12, window_bounds = array<i64: 1, 16, 256>}, {transform_indices = @transform_13, window_bounds = array<i64: 1, 16, 256>}, {transform_indices = @transform_14, window_bounds = array<i64: 1, 16, 256>}]} {
    %c0 = arith.constant 0 : index
    %c0_0 = arith.constant 0 : index
    %c0_1 = arith.constant 0 : index
    %0 = vector.load %arg3[%c0, %c0_0, %c0_1] : memref<2x64x128xf32, #tpu.memory_space<vmem>>, vector<1x64x128xf32>
    %1 = vector.shape_cast %0 : vector<1x64x128xf32> to vector<64x128xf32>
    %c0_2 = arith.constant 0 : index
    %c0_3 = arith.constant 0 : index
    %c0_4 = arith.constant 0 : index
    %2 = vector.load %arg4[%c0_2, %c0_3, %c0_4] : memref<2x64x128xf32, #tpu.memory_space<vmem>>, vector<1x64x128xf32>
    %3 = vector.shape_cast %2 : vector<1x64x128xf32> to vector<64x128xf32>
    %c1 = arith.constant 1 : index
    %c0_5 = arith.constant 0 : index
    %c0_6 = arith.constant 0 : index
    %4 = vector.load %arg3[%c1, %c0_5, %c0_6] : memref<2x64x128xf32, #tpu.memory_space<vmem>>, vector<1x64x128xf32>
    %5 = vector.shape_cast %4 : vector<1x64x128xf32> to vector<64x128xf32>
    %c1_7 = arith.constant 1 : index
    %c0_8 = arith.constant 0 : index
    %c0_9 = arith.constant 0 : index
    %6 = vector.load %arg4[%c1_7, %c0_8, %c0_9] : memref<2x64x128xf32, #tpu.memory_space<vmem>>, vector<1x64x128xf32>
    %7 = vector.shape_cast %6 : vector<1x64x128xf32> to vector<64x128xf32>
    %8 = arith.mulf %1, %5 : vector<64x128xf32>
    %9 = arith.mulf %3, %7 : vector<64x128xf32>
    %10 = arith.subf %8, %9 : vector<64x128xf32>
    %11 = arith.mulf %1, %7 : vector<64x128xf32>
    %12 = arith.mulf %3, %5 : vector<64x128xf32>
    %13 = arith.addf %11, %12 : vector<64x128xf32>
    %c0_10 = arith.constant 0 : index
    %c0_11 = arith.constant 0 : index
    %14 = vector.load %arg1[%c0_10, %c0_11] : memref<64x128xf32, #tpu.memory_space<vmem>>, vector<64x128xf32>
    %cst = arith.constant 1.41421354 : f32
    %15 = vector.broadcast %cst : f32 to vector<64x128xf32>
    %16 = arith.mulf %14, %15 : vector<64x128xf32>
    %c0_12 = arith.constant 0 : index
    %c0_13 = arith.constant 0 : index
    %17 = vector.load %arg2[%c0_12, %c0_13] : memref<64x128xf32, #tpu.memory_space<vmem>>, vector<64x128xf32>
    %cst_14 = arith.constant 1.41421354 : f32
    %18 = vector.broadcast %cst_14 : f32 to vector<64x128xf32>
    %19 = arith.mulf %17, %18 : vector<64x128xf32>
    %20 = arith.mulf %16, %10 : vector<64x128xf32>
    %21 = arith.mulf %19, %13 : vector<64x128xf32>
    %22 = arith.subf %20, %21 : vector<64x128xf32>
    %23 = arith.mulf %16, %13 : vector<64x128xf32>
    %24 = arith.mulf %19, %10 : vector<64x128xf32>
    %25 = arith.addf %23, %24 : vector<64x128xf32>
    %c0_15 = arith.constant 0 : index
    %c0_16 = arith.constant 0 : index
    %c0_17 = arith.constant 0 : index
    %26 = vector.load %arg5[%c0_15, %c0_16, %c0_17] : memref<1x64x128xf32, #tpu.memory_space<vmem>>, vector<1x64x128xf32>
    %27 = vector.shape_cast %26 : vector<1x64x128xf32> to vector<64x128xf32>
    %c0_18 = arith.constant 0 : index
    %c0_19 = arith.constant 0 : index
    %c0_20 = arith.constant 0 : index
    %28 = vector.load %arg6[%c0_18, %c0_19, %c0_20] : memref<1x64x128xf32, #tpu.memory_space<vmem>>, vector<1x64x128xf32>
    %29 = vector.shape_cast %28 : vector<1x64x128xf32> to vector<64x128xf32>
    %30 = arith.mulf %22, %27 : vector<64x128xf32>
    %31 = arith.mulf %25, %29 : vector<64x128xf32>
    %32 = arith.subf %30, %31 : vector<64x128xf32>
    %33 = arith.mulf %22, %29 : vector<64x128xf32>
    %34 = arith.mulf %25, %27 : vector<64x128xf32>
    %35 = arith.addf %33, %34 : vector<64x128xf32>
    %c0_21 = arith.constant 0 : index
    %c0_22 = arith.constant 0 : index
    %36 = vector.load %arg7[%c0_21, %c0_22] : memref<32x64xf32, #tpu.memory_space<vmem>>, vector<32x64xf32>
    %c0_23 = arith.constant 0 : index
    %c0_24 = arith.constant 0 : index
    %37 = vector.load %arg8[%c0_23, %c0_24] : memref<32x64xf32, #tpu.memory_space<vmem>>, vector<32x64xf32>
    %cst_25 = arith.constant dense<0.000000e+00> : vector<32x128xf32>
    %38 = tpu.matmul %36, %32, %cst_25 {dimension_numbers = #tpu.dot_dimension_numbers<[1], [0], [0], [1], [0, 0, 1, 1], [], []>} : vector<32x64xf32>, vector<64x128xf32>, vector<32x128xf32> -> vector<32x128xf32>
    %cst_26 = arith.constant dense<0.000000e+00> : vector<32x128xf32>
    %39 = tpu.matmul %37, %35, %cst_26 {dimension_numbers = #tpu.dot_dimension_numbers<[1], [0], [0], [1], [0, 0, 1, 1], [], []>} : vector<32x64xf32>, vector<64x128xf32>, vector<32x128xf32> -> vector<32x128xf32>
    %40 = arith.subf %38, %39 : vector<32x128xf32>
    %cst_27 = arith.constant dense<0.000000e+00> : vector<32x128xf32>
    %41 = tpu.matmul %36, %35, %cst_27 {dimension_numbers = #tpu.dot_dimension_numbers<[1], [0], [0], [1], [0, 0, 1, 1], [], []>} : vector<32x64xf32>, vector<64x128xf32>, vector<32x128xf32> -> vector<32x128xf32>
    %cst_28 = arith.constant dense<0.000000e+00> : vector<32x128xf32>
    %42 = tpu.matmul %37, %32, %cst_28 {dimension_numbers = #tpu.dot_dimension_numbers<[1], [0], [0], [1], [0, 0, 1, 1], [], []>} : vector<32x64xf32>, vector<64x128xf32>, vector<32x128xf32> -> vector<32x128xf32>
    %43 = arith.addf %41, %42 : vector<32x128xf32>
    %c0_29 = arith.constant 0 : index
    %c0_30 = arith.constant 0 : index
    %44 = vector.load %arg9[%c0_29, %c0_30] : memref<128x256xf32, #tpu.memory_space<vmem>>, vector<128x256xf32>
    %c0_31 = arith.constant 0 : index
    %c0_32 = arith.constant 0 : index
    %45 = vector.load %arg10[%c0_31, %c0_32] : memref<128x256xf32, #tpu.memory_space<vmem>>, vector<128x256xf32>
    %cst_33 = arith.constant dense<0.000000e+00> : vector<32x256xf32>
    %46 = tpu.matmul %40, %44, %cst_33 {dimension_numbers = #tpu.dot_dimension_numbers<[1], [0], [0], [1], [0, 0, 1, 1], [], []>} : vector<32x128xf32>, vector<128x256xf32>, vector<32x256xf32> -> vector<32x256xf32>
    %cst_34 = arith.constant dense<0.000000e+00> : vector<32x256xf32>
    %47 = tpu.matmul %43, %45, %cst_34 {dimension_numbers = #tpu.dot_dimension_numbers<[1], [0], [0], [1], [0, 0, 1, 1], [], []>} : vector<32x128xf32>, vector<128x256xf32>, vector<32x256xf32> -> vector<32x256xf32>
    %48 = arith.subf %46, %47 : vector<32x256xf32>
    %cst_35 = arith.constant dense<0.000000e+00> : vector<32x256xf32>
    %49 = tpu.matmul %40, %45, %cst_35 {dimension_numbers = #tpu.dot_dimension_numbers<[1], [0], [0], [1], [0, 0, 1, 1], [], []>} : vector<32x128xf32>, vector<128x256xf32>, vector<32x256xf32> -> vector<32x256xf32>
    %cst_36 = arith.constant dense<0.000000e+00> : vector<32x256xf32>
    %50 = tpu.matmul %43, %44, %cst_36 {dimension_numbers = #tpu.dot_dimension_numbers<[1], [0], [0], [1], [0, 0, 1, 1], [], []>} : vector<32x128xf32>, vector<128x256xf32>, vector<32x256xf32> -> vector<32x256xf32>
    %51 = arith.addf %49, %50 : vector<32x256xf32>
    %52 = vector.extract_strided_slice %48 {offsets = [0, 0], sizes = [16, 256], strides = [1, 1]} : vector<32x256xf32> to vector<16x256xf32>
    %53 = vector.extract_strided_slice %48 {offsets = [16, 0], sizes = [16, 256], strides = [1, 1]} : vector<32x256xf32> to vector<16x256xf32>
    %54 = vector.extract_strided_slice %51 {offsets = [0, 0], sizes = [16, 256], strides = [1, 1]} : vector<32x256xf32> to vector<16x256xf32>
    %55 = vector.extract_strided_slice %51 {offsets = [16, 0], sizes = [16, 256], strides = [1, 1]} : vector<32x256xf32> to vector<16x256xf32>
    %cst_37 = arith.constant 0.000000e+00 : f32
    %56 = vector.broadcast %cst_37 : f32 to vector<16x256xf32>
    %c0_38 = arith.constant 0 : index
    %c0_39 = arith.constant 0 : index
    %c0_40 = arith.constant 0 : index
    %c0_41 = arith.constant 0 : index
    %57 = vector.load %arg11[%c0_38, %c0_39, %c0_40, %c0_41] : memref<2x2x1x256xf32, #tpu.memory_space<vmem>>, vector<1x1x1x256xf32>
    %58 = vector.shape_cast %57 : vector<1x1x1x256xf32> to vector<1x256xf32>
    %c0_42 = arith.constant 0 : index
    %c0_43 = arith.constant 0 : index
    %c0_44 = arith.constant 0 : index
    %c0_45 = arith.constant 0 : index
    %59 = vector.load %arg12[%c0_42, %c0_43, %c0_44, %c0_45] : memref<2x2x1x256xf32, #tpu.memory_space<vmem>>, vector<1x1x1x256xf32>
    %60 = vector.shape_cast %59 : vector<1x1x1x256xf32> to vector<1x256xf32>
    %c0_46 = arith.constant 0 : index
    %c1_47 = arith.constant 1 : index
    %c0_48 = arith.constant 0 : index
    %c0_49 = arith.constant 0 : index
    %61 = vector.load %arg11[%c0_46, %c1_47, %c0_48, %c0_49] : memref<2x2x1x256xf32, #tpu.memory_space<vmem>>, vector<1x1x1x256xf32>
    %62 = vector.shape_cast %61 : vector<1x1x1x256xf32> to vector<1x256xf32>
    %c0_50 = arith.constant 0 : index
    %c1_51 = arith.constant 1 : index
    %c0_52 = arith.constant 0 : index
    %c0_53 = arith.constant 0 : index
    %63 = vector.load %arg12[%c0_50, %c1_51, %c0_52, %c0_53] : memref<2x2x1x256xf32, #tpu.memory_space<vmem>>, vector<1x1x1x256xf32>
    %64 = vector.shape_cast %63 : vector<1x1x1x256xf32> to vector<1x256xf32>
    %65 = vector.broadcast %58 : vector<1x256xf32> to vector<16x256xf32>
    %66 = arith.mulf %65, %52 : vector<16x256xf32>
    %67 = vector.broadcast %60 : vector<1x256xf32> to vector<16x256xf32>
    %68 = arith.mulf %67, %54 : vector<16x256xf32>
    %69 = arith.subf %66, %68 : vector<16x256xf32>
    %70 = vector.broadcast %62 : vector<1x256xf32> to vector<16x256xf32>
    %71 = arith.mulf %70, %53 : vector<16x256xf32>
    %72 = arith.addf %69, %71 : vector<16x256xf32>
    %73 = vector.broadcast %64 : vector<1x256xf32> to vector<16x256xf32>
    %74 = arith.mulf %73, %55 : vector<16x256xf32>
    %75 = arith.subf %72, %74 : vector<16x256xf32>
    %76 = vector.broadcast %58 : vector<1x256xf32> to vector<16x256xf32>
    %77 = arith.mulf %76, %54 : vector<16x256xf32>
    %78 = vector.broadcast %60 : vector<1x256xf32> to vector<16x256xf32>
    %79 = arith.mulf %78, %52 : vector<16x256xf32>
    %80 = arith.addf %77, %79 : vector<16x256xf32>
    %81 = vector.broadcast %62 : vector<1x256xf32> to vector<16x256xf32>
    %82 = arith.mulf %81, %55 : vector<16x256xf32>
    %83 = arith.addf %80, %82 : vector<16x256xf32>
    %84 = vector.broadcast %64 : vector<1x256xf32> to vector<16x256xf32>
    %85 = arith.mulf %84, %53 : vector<16x256xf32>
    %86 = arith.addf %83, %85 : vector<16x256xf32>
    %87 = arith.mulf %75, %75 : vector<16x256xf32>
    %88 = arith.addf %56, %87 : vector<16x256xf32>
    %89 = arith.mulf %86, %86 : vector<16x256xf32>
    %90 = arith.addf %88, %89 : vector<16x256xf32>
    %c1_54 = arith.constant 1 : index
    %c0_55 = arith.constant 0 : index
    %c0_56 = arith.constant 0 : index
    %c0_57 = arith.constant 0 : index
    %91 = vector.load %arg11[%c1_54, %c0_55, %c0_56, %c0_57] : memref<2x2x1x256xf32, #tpu.memory_space<vmem>>, vector<1x1x1x256xf32>
    %92 = vector.shape_cast %91 : vector<1x1x1x256xf32> to vector<1x256xf32>
    %c1_58 = arith.constant 1 : index
    %c0_59 = arith.constant 0 : index
    %c0_60 = arith.constant 0 : index
    %c0_61 = arith.constant 0 : index
    %93 = vector.load %arg12[%c1_58, %c0_59, %c0_60, %c0_61] : memref<2x2x1x256xf32, #tpu.memory_space<vmem>>, vector<1x1x1x256xf32>
    %94 = vector.shape_cast %93 : vector<1x1x1x256xf32> to vector<1x256xf32>
    %c1_62 = arith.constant 1 : index
    %c1_63 = arith.constant 1 : index
    %c0_64 = arith.constant 0 : index
    %c0_65 = arith.constant 0 : index
    %95 = vector.load %arg11[%c1_62, %c1_63, %c0_64, %c0_65] : memref<2x2x1x256xf32, #tpu.memory_space<vmem>>, vector<1x1x1x256xf32>
    %96 = vector.shape_cast %95 : vector<1x1x1x256xf32> to vector<1x256xf32>
    %c1_66 = arith.constant 1 : index
    %c1_67 = arith.constant 1 : index
    %c0_68 = arith.constant 0 : index
    %c0_69 = arith.constant 0 : index
    %97 = vector.load %arg12[%c1_66, %c1_67, %c0_68, %c0_69] : memref<2x2x1x256xf32, #tpu.memory_space<vmem>>, vector<1x1x1x256xf32>
    %98 = vector.shape_cast %97 : vector<1x1x1x256xf32> to vector<1x256xf32>
    %99 = vector.broadcast %92 : vector<1x256xf32> to vector<16x256xf32>
    %100 = arith.mulf %99, %52 : vector<16x256xf32>
    %101 = vector.broadcast %94 : vector<1x256xf32> to vector<16x256xf32>
    %102 = arith.mulf %101, %54 : vector<16x256xf32>
    %103 = arith.subf %100, %102 : vector<16x256xf32>
    %104 = vector.broadcast %96 : vector<1x256xf32> to vector<16x256xf32>
    %105 = arith.mulf %104, %53 : vector<16x256xf32>
    %106 = arith.addf %103, %105 : vector<16x256xf32>
    %107 = vector.broadcast %98 : vector<1x256xf32> to vector<16x256xf32>
    %108 = arith.mulf %107, %55 : vector<16x256xf32>
    %109 = arith.subf %106, %108 : vector<16x256xf32>
    %110 = vector.broadcast %92 : vector<1x256xf32> to vector<16x256xf32>
    %111 = arith.mulf %110, %54 : vector<16x256xf32>
    %112 = vector.broadcast %94 : vector<1x256xf32> to vector<16x256xf32>
    %113 = arith.mulf %112, %52 : vector<16x256xf32>
    %114 = arith.addf %111, %113 : vector<16x256xf32>
    %115 = vector.broadcast %96 : vector<1x256xf32> to vector<16x256xf32>
    %116 = arith.mulf %115, %55 : vector<16x256xf32>
    %117 = arith.addf %114, %116 : vector<16x256xf32>
    %118 = vector.broadcast %98 : vector<1x256xf32> to vector<16x256xf32>
    %119 = arith.mulf %118, %53 : vector<16x256xf32>
    %120 = arith.addf %117, %119 : vector<16x256xf32>
    %121 = arith.mulf %109, %109 : vector<16x256xf32>
    %122 = arith.addf %90, %121 : vector<16x256xf32>
    %123 = arith.mulf %120, %120 : vector<16x256xf32>
    %124 = arith.addf %122, %123 : vector<16x256xf32>
    %c0_70 = arith.constant 0 : index
    %c0_71 = arith.constant 0 : index
    %c0_72 = arith.constant 0 : index
    %125 = vector.load %arg13[%c0_70, %c0_71, %c0_72] : memref<1x16x256xf32, #tpu.memory_space<vmem>>, vector<1x16x256xf32>
    %126 = vector.shape_cast %125 : vector<1x16x256xf32> to vector<16x256xf32>
    %127 = arith.mulf %126, %124 : vector<16x256xf32>
    %c0_73 = arith.constant 0 : index
    %c0_74 = arith.constant 0 : index
    %c0_75 = arith.constant 0 : index
    %128 = vector.load %arg14[%c0_73, %c0_74, %c0_75] : memref<1x16x256xf32, #tpu.memory_space<vmem>>, vector<1x16x256xf32>
    %129 = vector.shape_cast %128 : vector<1x16x256xf32> to vector<16x256xf32>
    %130 = arith.addf %127, %129 : vector<16x256xf32>
    %c0_76 = arith.constant 0 : index
    %c0_77 = arith.constant 0 : index
    %c0_78 = arith.constant 0 : index
    %131 = vector.load %arg15[%c0_76, %c0_77, %c0_78] : memref<1x16x256xf32, #tpu.memory_space<vmem>>, vector<1x16x256xf32>
    %132 = vector.shape_cast %131 : vector<1x16x256xf32> to vector<16x256xf32>
    %133 = vector.shape_cast %130 : vector<16x256xf32> to vector<1x16x256xf32>
    tpu.vector_store %arg15[%c0_76, %c0_77, %c0_78], %133 {strides = array<i32>} : memref<1x16x256xf32, #tpu.memory_space<vmem>>, vector<1x16x256xf32>,
    return
  }
  func.func @transform_0(%arg0: i32) -> (i32, i32) {
    %c0_i32 = arith.constant 0 : i32
    %c0_i32_0 = arith.constant 0 : i32
    %c0_i32_1 = arith.constant 0 : i32
    return %c0_i32, %c0_i32_0 : i32, i32
  }
  func.func @transform_1(%arg0: i32) -> (i32, i32) {
    %c0_i32 = arith.constant 0 : i32
    %c0_i32_0 = arith.constant 0 : i32
    %c0_i32_1 = arith.constant 0 : i32
    return %c0_i32, %c0_i32_0 : i32, i32
  }
  func.func @transform_2(%arg0: i32) -> (i32, i32, i32) {
    %c0_i32 = arith.constant 0 : i32
    %c0_i32_0 = arith.constant 0 : i32
    %c0_i32_1 = arith.constant 0 : i32
    %c0_i32_2 = arith.constant 0 : i32
    return %c0_i32, %c0_i32_0, %c0_i32_1 : i32, i32, i32
  }
  func.func @transform_3(%arg0: i32) -> (i32, i32, i32) {
    %c0_i32 = arith.constant 0 : i32
    %c0_i32_0 = arith.constant 0 : i32
    %c0_i32_1 = arith.constant 0 : i32
    %c0_i32_2 = arith.constant 0 : i32
    return %c0_i32, %c0_i32_0, %c0_i32_1 : i32, i32, i32
  }
  func.func @transform_4(%arg0: i32) -> (i32, i32, i32) {
    %c0_i32 = arith.constant 0 : i32
    %c0_i32_0 = arith.constant 0 : i32
    %c0_i32_1 = arith.constant 0 : i32
    return %arg0, %c0_i32, %c0_i32_0 : i32, i32, i32
  }
  func.func @transform_5(%arg0: i32) -> (i32, i32, i32) {
    %c0_i32 = arith.constant 0 : i32
    %c0_i32_0 = arith.constant 0 : i32
    %c0_i32_1 = arith.constant 0 : i32
    return %arg0, %c0_i32, %c0_i32_0 : i32, i32, i32
  }
  func.func @transform_6(%arg0: i32) -> (i32, i32) {
    %c0_i32 = arith.constant 0 : i32
    %c0_i32_0 = arith.constant 0 : i32
    %c0_i32_1 = arith.constant 0 : i32
    return %c0_i32, %c0_i32_0 : i32, i32
  }
  func.func @transform_7(%arg0: i32) -> (i32, i32) {
    %c0_i32 = arith.constant 0 : i32
    %c0_i32_0 = arith.constant 0 : i32
    %c0_i32_1 = arith.constant 0 : i32
    return %c0_i32, %c0_i32_0 : i32, i32
  }
  func.func @transform_8(%arg0: i32) -> (i32, i32) {
    %c0_i32 = arith.constant 0 : i32
    %c0_i32_0 = arith.constant 0 : i32
    %c0_i32_1 = arith.constant 0 : i32
    return %c0_i32, %c0_i32_0 : i32, i32
  }
  func.func @transform_9(%arg0: i32) -> (i32, i32) {
    %c0_i32 = arith.constant 0 : i32
    %c0_i32_0 = arith.constant 0 : i32
    %c0_i32_1 = arith.constant 0 : i32
    return %c0_i32, %c0_i32_0 : i32, i32
  }
  func.func @transform_10(%arg0: i32) -> (i32, i32, i32, i32) {
    %c0_i32 = arith.constant 0 : i32
    %c0_i32_0 = arith.constant 0 : i32
    %c0_i32_1 = arith.constant 0 : i32
    %c0_i32_2 = arith.constant 0 : i32
    %c0_i32_3 = arith.constant 0 : i32
    return %c0_i32, %c0_i32_0, %c0_i32_1, %c0_i32_2 : i32, i32, i32, i32
  }
  func.func @transform_11(%arg0: i32) -> (i32, i32, i32, i32) {
    %c0_i32 = arith.constant 0 : i32
    %c0_i32_0 = arith.constant 0 : i32
    %c0_i32_1 = arith.constant 0 : i32
    %c0_i32_2 = arith.constant 0 : i32
    %c0_i32_3 = arith.constant 0 : i32
    return %c0_i32, %c0_i32_0, %c0_i32_1, %c0_i32_2 : i32, i32, i32, i32
  }
  func.func @transform_12(%arg0: i32) -> (i32, i32, i32) {
    %c0_i32 = arith.constant 0 : i32
    %c0_i32_0 = arith.constant 0 : i32
    %c0_i32_1 = arith.constant 0 : i32
    return %arg0, %c0_i32, %c0_i32_0 : i32, i32, i32
  }
  func.func @transform_13(%arg0: i32) -> (i32, i32, i32) {
    %c0_i32 = arith.constant 0 : i32
    %c0_i32_0 = arith.constant 0 : i32
    %c0_i32_1 = arith.constant 0 : i32
    return %arg0, %c0_i32, %c0_i32_0 : i32, i32, i32
  }
  func.func @transform_14(%arg0: i32) -> (i32, i32, i32) {
    %c0_i32 = arith.constant 0 : i32
    %c0_i32_0 = arith.constant 0 : i32
    %c0_i32_1 = arith.constant 0 : i32
    return %arg0, %c0_i32, %c0_i32_0 : i32, i32, i32
  }
}

</mosaic_0001>

<llo_original>
// kernel: tpu_custom_call.1
$region0: #{tpu_custom_call.1}
  #allocation0 [shape = 'u32[]', space=smem, size = 0x4, offset = 0x4, fixed_abs, tag = 'smem constant byte address 0x4 - core index']
  #allocation1 [shape = 'u32[144,128]{1,0:T(1,128)}', space=vmem, size = 0x12000, scoped, tag = 'internal scratch']
  %s0 = inlined_call_operand.hbm [shape: f32[64,128], index: 0, kind: input, shape index: {}]
  %s1 = inlined_call_operand.hbm [shape: f32[64,128], index: 1, kind: input, shape index: {}]
  %s2 = inlined_call_operand.hbm [shape: f32[2,64,128], index: 2, kind: input, shape index: {}]
  %s3 = inlined_call_operand.hbm [shape: f32[2,64,128], index: 3, kind: input, shape index: {}]
  %s4 = inlined_call_operand.hbm [shape: f32[1,64,128], index: 4, kind: input, shape index: {}]
  %s5 = inlined_call_operand.hbm [shape: f32[1,64,128], index: 5, kind: input, shape index: {}]
  %s6 = inlined_call_operand.hbm [shape: f32[32,64], index: 6, kind: input, shape index: {}]
  %s7 = inlined_call_operand.hbm [shape: f32[32,64], index: 7, kind: input, shape index: {}]
  %s8 = inlined_call_operand.hbm [shape: f32[128,256], index: 8, kind: input, shape index: {}]
  %s9 = inlined_call_operand.hbm [shape: f32[128,256], index: 9, kind: input, shape index: {}]
  %s10 = inlined_call_operand.vmem [shape: f32[2,2,1,256], index: 10, kind: input, shape index: {}]
  %s11 = inlined_call_operand.hbm [shape: f32[2,2,1,256], index: 11, kind: input, shape index: {}]
  %s12 = inlined_call_operand.vmem [shape: f32[1,16,256], index: 12, kind: input, shape index: {}]
  %s13 = inlined_call_operand.hbm [shape: f32[1,16,256], index: 13, kind: input, shape index: {}]
  %s14 = inlined_call_operand.hbm [shape: f32[1,16,256], index: 14, kind: output, shape index: {}]
  %s15 = sld [smem:[#allocation0]]
  $region114: #{tpu_custom_call.1} parent=0
    _
  %s17 = ssub.s32 1, %s15
  %s18 = scalar_select 0, %s17, %s15
  $region1: #{tpu_custom_call.1} parent=0
    #allocation2 [shape = 'u8[32768]{0}', space=vmem, size = 0x8000, scoped, tag = 'input window, operand 0, single buffered']
    #allocation3 [shape = 's32[1]{0}', space=sflag, size = 0x4, scoped, tag = 'scoped memory for tpu_custom_call.1']
    #allocation4 [shape = 's32[1]{0}', space=sflag, size = 0x4, scoped, tag = 'scoped memory for tpu_custom_call.1']
    #allocation5 [shape = 'u8[32768]{0}', space=vmem, size = 0x8000, scoped, tag = 'input window, operand 1, single buffered']
    #allocation6 [shape = 's32[1]{0}', space=sflag, size = 0x4, scoped, tag = 'scoped memory for tpu_custom_call.1']
    #allocation7 [shape = 'u8[65536]{0}', space=vmem, size = 0x10000, scoped, tag = 'input window, operand 2, single buffered']
    #allocation8 [shape = 'u8[65536]{0}', space=vmem, size = 0x10000, scoped, tag = 'input window, operand 3, single buffered']
    #allocation9 [shape = 's32[1]{0}', space=sflag, size = 0x4, scoped, tag = 'scoped memory for tpu_custom_call.1']
    #allocation10 [shape = 'u8[32768]{0}', space=vmem, size = 0x8000, scoped, tag = 'input window, operand 4, single buffered']
    #allocation11 [shape = 'u8[32768]{0}', space=vmem, size = 0x8000, scoped, tag = 'input window, operand 5, single buffered']
    #allocation12 [shape = 's32[1]{0}', space=sflag, size = 0x4, scoped, tag = 'scoped memory for tpu_custom_call.1']
    #allocation13 [shape = 'u8[16384]{0}', space=vmem, size = 0x4000, scoped, tag = 'input window, operand 6, single buffered']
    #allocation14 [shape = 'u8[16384]{0}', space=vmem, size = 0x4000, scoped, tag = 'input window, operand 7, single buffered']
    #allocation15 [shape = 's32[1]{0}', space=sflag, size = 0x4, scoped, tag = 'scoped memory for tpu_custom_call.1']
    #allocation16 [shape = 'u8[131072]{0}', space=vmem, size = 0x20000, scoped, tag = 'input window, operand 8, single buffered']
    #allocation17 [shape = 'u8[131072]{0}', space=vmem, size = 0x20000, scoped, tag = 'input window, operand 9, single buffered']
    #allocation18 [shape = 's32[1]{0}', space=sflag, size = 0x4, scoped, tag = 'scoped memory for tpu_custom_call.1']
    #allocation19 [shape = 'u8[4096]{0}', space=vmem, size = 0x1000, scoped, tag = 'input window, operand 11, single buffered']
    #allocation20 [shape = 'u8[16384]{0}', space=vmem, size = 0x4000, scoped, tag = 'input window, operand 13, single buffered']
    #allocation21 [shape = 's32[1]{0}', space=sflag, size = 0x4, scoped, tag = 'scoped memory for tpu_custom_call.1']
    #allocation22 [shape = 'u8[16384]{0}', space=vmem, size = 0x4000, scoped, tag = 'output window, operand 0, single buffered']
    %19 = vsyncpa [#allocation3], 0
    %20 = vsyncpa [#allocation6], 0
    %21 = vsyncpa [#allocation9], 0
    %22 = vsyncpa [#allocation12], 0
    %23 = vsyncpa [#allocation15], 0
    %24 = vsyncpa [#allocation18], 0
    %25 = vsyncpa [#allocation21], 0
    %26 = vsyncpa [#allocation4], 0
    // Predicated region
    $region2: #{tpu_custom_call.1} parent=1 // pred_check
      _
    $region3: #{tpu_custom_call.1} parent=1 // pred_check_branch
      %28 = sbr.rel (0) target = $region5
    $region4: #{tpu_custom_call.1} parent=1 // pred_region
      %s30 = ssub.s32 1024, 1024
      %31 = vsyncadd [#allocation3], %s30
      %s32 = sshll.u32 [#allocation2], 4
      %s33 = int_to_ptr.vmem [resolvable:$true] %s32
      %38 = dma.hbm_to_vmem [thread:$0]  %s0, 1024, %s33, [#allocation3], 128, 128, 8
    $region5: #{tpu_custom_call.1} parent=1 // pred_fallthru
      _
    // Predicated region
    $region6: #{tpu_custom_call.1} parent=1 // pred_check
      _
    $region7: #{tpu_custom_call.1} parent=1 // pred_check_branch
      %40 = sbr.rel (0) target = $region9
    $region8: #{tpu_custom_call.1} parent=1 // pred_region
      %s42 = ssub.s32 1024, 1024
      %43 = vsyncadd [#allocation6], %s42
      %s44 = sshll.u32 [#allocation5], 4
      %s45 = int_to_ptr.vmem [resolvable:$true] %s44
      %50 = dma.hbm_to_vmem [thread:$0]  %s1, 1024, %s45, [#allocation6], 128, 128, 8
    $region9: #{tpu_custom_call.1} parent=1 // pred_fallthru
      _
    // Predicated region
    $region10: #{tpu_custom_call.1} parent=1 // pred_check
      _
    $region11: #{tpu_custom_call.1} parent=1 // pred_check_branch
      %52 = sbr.rel (0) target = $region13
    $region12: #{tpu_custom_call.1} parent=1 // pred_region
      %s54 = ssub.s32 2048, 2048
      %55 = vsyncadd [#allocation6], %s54
      %s56 = sshll.u32 [#allocation7], 4
      %s57 = int_to_ptr.vmem [resolvable:$true] %s56
      %62 = dma.hbm_to_vmem [thread:$0]  %s2, 2048, %s57, [#allocation6], 128, 128, 8
    $region13: #{tpu_custom_call.1} parent=1 // pred_fallthru
      _
    // Predicated region
    $region14: #{tpu_custom_call.1} parent=1 // pred_check
      _
    $region15: #{tpu_custom_call.1} parent=1 // pred_check_branch
      %64 = sbr.rel (0) target = $region17
    $region16: #{tpu_custom_call.1} parent=1 // pred_region
      %s66 = ssub.s32 2048, 2048
      %67 = vsyncadd [#allocation9], %s66
      %s68 = sshll.u32 [#allocation8], 4
      %s69 = int_to_ptr.vmem [resolvable:$true] %s68
      %74 = dma.hbm_to_vmem [thread:$0]  %s3, 2048, %s69, [#allocation9], 128, 128, 8
    $region17: #{tpu_custom_call.1} parent=1 // pred_fallthru
      _
    // Predicated region
    $region18: #{tpu_custom_call.1} parent=1 // pred_check
      _
    $region19: #{tpu_custom_call.1} parent=1 // pred_check_branch
      %76 = sbr.rel (0) target = $region21
    $region20: #{tpu_custom_call.1} parent=1 // pred_region
      %s78 = ssub.s32 1024, 1024
      %79 = vsyncadd [#allocation9], %s78
      %s80 = sshll.u32 [#allocation10], 4
      %s81 = int_to_ptr.vmem [resolvable:$true] %s80
      %86 = dma.hbm_to_vmem [thread:$0]  %s4, 1024, %s81, [#allocation9], 128, 128, 8
    $region21: #{tpu_custom_call.1} parent=1 // pred_fallthru
      _
    // Predicated region
    $region22: #{tpu_custom_call.1} parent=1 // pred_check
      _
    $region23: #{tpu_custom_call.1} parent=1 // pred_check_branch
      %88 = sbr.rel (0) target = $region25
    $region24: #{tpu_custom_call.1} parent=1 // pred_region
      %s90 = ssub.s32 1024, 1024
      %91 = vsyncadd [#allocation12], %s90
      %s92 = sshll.u32 [#allocation11], 4
      %s93 = int_to_ptr.vmem [resolvable:$true] %s92
      %98 = dma.hbm_to_vmem [thread:$0]  %s5, 1024, %s93, [#allocation12], 128, 128, 8
    $region25: #{tpu_custom_call.1} parent=1 // pred_fallthru
      _
    // Predicated region
    $region26: #{tpu_custom_call.1} parent=1 // pred_check
      _
    $region27: #{tpu_custom_call.1} parent=1 // pred_check_branch
      %100 = sbr.rel (0) target = $region29
    $region28: #{tpu_custom_call.1} parent=1 // pred_region
      %s102 = ssub.s32 512, 512
      %103 = vsyncadd [#allocation12], %s102
      %s104 = sshll.u32 [#allocation13], 4
      %s105 = int_to_ptr.vmem [resolvable:$true] %s104
      %110 = dma.hbm_to_vmem [thread:$0]  %s6, 512, %s105, [#allocation12], 128, 128, 8
    $region29: #{tpu_custom_call.1} parent=1 // pred_fallthru
      _
    // Predicated region
    $region30: #{tpu_custom_call.1} parent=1 // pred_check
      _
    $region31: #{tpu_custom_call.1} parent=1 // pred_check_branch
      %112 = sbr.rel (0) target = $region33
    $region32: #{tpu_custom_call.1} parent=1 // pred_region
      %s114 = ssub.s32 512, 512
      %115 = vsyncadd [#allocation15], %s114
      %s116 = sshll.u32 [#allocation14], 4
      %s117 = int_to_ptr.vmem [resolvable:$true] %s116
      %122 = dma.hbm_to_vmem [thread:$0]  %s7, 512, %s117, [#allocation15], 128, 128, 8
    $region33: #{tpu_custom_call.1} parent=1 // pred_fallthru
      _
    // Predicated region
    $region34: #{tpu_custom_call.1} parent=1 // pred_check
      _
    $region35: #{tpu_custom_call.1} parent=1 // pred_check_branch
      %124 = sbr.rel (0) target = $region37
    $region36: #{tpu_custom_call.1} parent=1 // pred_region
      %s126 = ssub.s32 4096, 4096
      %127 = vsyncadd [#allocation15], %s126
      %s128 = sshll.u32 [#allocation16], 4
      %s129 = int_to_ptr.vmem [resolvable:$true] %s128
      %134 = dma.hbm_to_vmem [thread:$0]  %s8, 4096, %s129, [#allocation15], 256, 256, 16
    $region37: #{tpu_custom_call.1} parent=1 // pred_fallthru
      _
    // Predicated region
    $region38: #{tpu_custom_call.1} parent=1 // pred_check
      _
    $region39: #{tpu_custom_call.1} parent=1 // pred_check_branch
      %136 = sbr.rel (0) target = $region41
    $region40: #{tpu_custom_call.1} parent=1 // pred_region
      %s138 = ssub.s32 4096, 4096
      %139 = vsyncadd [#allocation18], %s138
      %s140 = sshll.u32 [#allocation17], 4
      %s141 = int_to_ptr.vmem [resolvable:$true] %s140
      %146 = dma.hbm_to_vmem [thread:$0]  %s9, 4096, %s141, [#allocation18], 256, 256, 16
    $region41: #{tpu_custom_call.1} parent=1 // pred_fallthru
      _
    // Predicated region
    $region42: #{tpu_custom_call.1} parent=1 // pred_check
      _
    $region43: #{tpu_custom_call.1} parent=1 // pred_check_branch
      %148 = sbr.rel (0) target = $region45
    $region44: #{tpu_custom_call.1} parent=1 // pred_region
      _
    $region45: #{tpu_custom_call.1} parent=1 // pred_fallthru
      _
    // Predicated region
    $region46: #{tpu_custom_call.1} parent=1 // pred_check
      _
    $region47: #{tpu_custom_call.1} parent=1 // pred_check_branch
      %150 = sbr.rel (0) target = $region49
    $region48: #{tpu_custom_call.1} parent=1 // pred_region
      %s152 = ssub.s32 128, 128
      %153 = vsyncadd [#allocation18], %s152
      %s154 = sshll.u32 [#allocation19], 4
      %s155 = int_to_ptr.vmem [resolvable:$true] %s154
      %160 = dma.hbm_to_vmem [thread:$0]  %s11, 128, %s155, [#allocation18], 32, 32, 2
    $region49: #{tpu_custom_call.1} parent=1 // pred_fallthru
      _
    // Predicated region
    $region50: #{tpu_custom_call.1} parent=1 // pred_check
      _
    $region51: #{tpu_custom_call.1} parent=1 // pred_check_branch
      %162 = sbr.rel (0) target = $region53
    $region52: #{tpu_custom_call.1} parent=1 // pred_region
      _
    $region53: #{tpu_custom_call.1} parent=1 // pred_fallthru
      _
    // Predicated region
    $region54: #{tpu_custom_call.1} parent=1 // pred_check
      _
    $region55: #{tpu_custom_call.1} parent=1 // pred_check_branch
      %164 = sbr.rel (0) target = $region57
    $region56: #{tpu_custom_call.1} parent=1 // pred_region
      %s166 = ssub.s32 512, 512
      %167 = vsyncadd [#allocation21], %s166
      %s168 = sshll.u32 [#allocation20], 4
      %s169 = int_to_ptr.vmem [resolvable:$true] %s168
      %174 = dma.hbm_to_vmem [thread:$0]  %s13, 512, %s169, [#allocation21], 256, 256, 16
    $region57: #{tpu_custom_call.1} parent=1 // pred_fallthru
      _
    // Predicated region
    $region58: #{tpu_custom_call.1} parent=1 // pred_check
      _
    $region59: #{tpu_custom_call.1} parent=1 // pred_check_branch
      %176 = sbr.rel (0) target = $region61
    $region60: #{tpu_custom_call.1} parent=1 // pred_region
      %177 = dma.done [#allocation3], 1024
    $region61: #{tpu_custom_call.1} parent=1 // pred_fallthru
      _
    // Predicated region
    $region62: #{tpu_custom_call.1} parent=1 // pred_check
      _
    $region63: #{tpu_custom_call.1} parent=1 // pred_check_branch
      %179 = sbr.rel (0) target = $region65
    $region64: #{tpu_custom_call.1} parent=1 // pred_region
      %180 = dma.done [#allocation6], 1024
    $region65: #{tpu_custom_call.1} parent=1 // pred_fallthru
      _
    // Predicated region
    $region66: #{tpu_custom_call.1} parent=1 // pred_check
      _
    $region67: #{tpu_custom_call.1} parent=1 // pred_check_branch
      %182 = sbr.rel (0) target = $region69
    $region68: #{tpu_custom_call.1} parent=1 // pred_region
      %183 = dma.done [#allocation6], 2048
    $region69: #{tpu_custom_call.1} parent=1 // pred_fallthru
      _
    // Predicated region
    $region70: #{tpu_custom_call.1} parent=1 // pred_check
      _
    $region71: #{tpu_custom_call.1} parent=1 // pred_check_branch
      %185 = sbr.rel (0) target = $region73
    $region72: #{tpu_custom_call.1} parent=1 // pred_region
      %186 = dma.done [#allocation9], 2048
    $region73: #{tpu_custom_call.1} parent=1 // pred_fallthru
      _
    // Predicated region
    $region74: #{tpu_custom_call.1} parent=1 // pred_check
      _
    $region75: #{tpu_custom_call.1} parent=1 // pred_check_branch
      %188 = sbr.rel (0) target = $region77
    $region76: #{tpu_custom_call.1} parent=1 // pred_region
      %189 = dma.done [#allocation9], 1024
    $region77: #{tpu_custom_call.1} parent=1 // pred_fallthru
      _
    // Predicated region
    $region78: #{tpu_custom_call.1} parent=1 // pred_check
      _
    $region79: #{tpu_custom_call.1} parent=1 // pred_check_branch
      %191 = sbr.rel (0) target = $region81
    $region80: #{tpu_custom_call.1} parent=1 // pred_region
      %192 = dma.done [#allocation12], 1024
    $region81: #{tpu_custom_call.1} parent=1 // pred_fallthru
      _
    // Predicated region
    $region82: #{tpu_custom_call.1} parent=1 // pred_check
      _
    $region83: #{tpu_custom_call.1} parent=1 // pred_check_branch
      %194 = sbr.rel (0) target = $region85
    $region84: #{tpu_custom_call.1} parent=1 // pred_region
      %195 = dma.done [#allocation12], 512
    $region85: #{tpu_custom_call.1} parent=1 // pred_fallthru
      _
    // Predicated region
    $region86: #{tpu_custom_call.1} parent=1 // pred_check
      _
    $region87: #{tpu_custom_call.1} parent=1 // pred_check_branch
      %197 = sbr.rel (0) target = $region89
    $region88: #{tpu_custom_call.1} parent=1 // pred_region
      %198 = dma.done [#allocation15], 512
    $region89: #{tpu_custom_call.1} parent=1 // pred_fallthru
      _
    // Predicated region
    $region90: #{tpu_custom_call.1} parent=1 // pred_check
      _
    $region91: #{tpu_custom_call.1} parent=1 // pred_check_branch
      %200 = sbr.rel (0) target = $region93
    $region92: #{tpu_custom_call.1} parent=1 // pred_region
      %201 = dma.done [#allocation15], 4096
    $region93: #{tpu_custom_call.1} parent=1 // pred_fallthru
      _
    // Predicated region
    $region94: #{tpu_custom_call.1} parent=1 // pred_check
      _
    $region95: #{tpu_custom_call.1} parent=1 // pred_check_branch
      %203 = sbr.rel (0) target = $region97
    $region96: #{tpu_custom_call.1} parent=1 // pred_region
      %204 = dma.done [#allocation18], 4096
    $region97: #{tpu_custom_call.1} parent=1 // pred_fallthru
      _
    // Predicated region
    $region98: #{tpu_custom_call.1} parent=1 // pred_check
      _
    $region99: #{tpu_custom_call.1} parent=1 // pred_check_branch
      %206 = sbr.rel (0) target = $region101
    $region100: #{tpu_custom_call.1} parent=1 // pred_region
      %207 = dma.done [#allocation18], 128
    $region101: #{tpu_custom_call.1} parent=1 // pred_fallthru
      _
    // Predicated region
    $region102: #{tpu_custom_call.1} parent=1 // pred_check
      _
    $region103: #{tpu_custom_call.1} parent=1 // pred_check_branch
      %209 = sbr.rel (0) target = $region105
    $region104: #{tpu_custom_call.1} parent=1 // pred_region
      %210 = dma.done [#allocation21], 512
    $region105: #{tpu_custom_call.1} parent=1 // pred_fallthru
      _
    %v211 = vld [vmem:[#allocation7] sm:$0xff]
    %v212 = vld [vmem:[#allocation7 + $0x8] sm:$0xff]
    %v213 = vld [vmem:[#allocation7 + $0x10] sm:$0xff]
    %v214 = vld [vmem:[#allocation7 + $0x18] sm:$0xff]
    %v215 = vld [vmem:[#allocation7 + $0x20] sm:$0xff]
    %v216 = vld [vmem:[#allocation7 + $0x28] sm:$0xff]
    %v217 = vld [vmem:[#allocation7 + $0x30] sm:$0xff]
    %v218 = vld [vmem:[#allocation7 + $0x38] sm:$0xff]
    %v219 = vld [vmem:[#allocation8] sm:$0xff]
    %v220 = vld [vmem:[#allocation8 + $0x8] sm:$0xff]
    %v221 = vld [vmem:[#allocation8 + $0x10] sm:$0xff]
    %v222 = vld [vmem:[#allocation8 + $0x18] sm:$0xff]
    %v223 = vld [vmem:[#allocation8 + $0x20] sm:$0xff]
    %v224 = vld [vmem:[#allocation8 + $0x28] sm:$0xff]
    %v225 = vld [vmem:[#allocation8 + $0x30] sm:$0xff]
    %v226 = vld [vmem:[#allocation8 + $0x38] sm:$0xff]
    %s227 = scalar_lea.vmem [#allocation7], 64
    %v228 = vld [vmem:[%s227] sm:$0xff]
    %v229 = vld [vmem:[%s227 + $0x8] sm:$0xff]
    %v230 = vld [vmem:[%s227 + $0x10] sm:$0xff]
    %v231 = vld [vmem:[%s227 + $0x18] sm:$0xff]
    %v232 = vld [vmem:[%s227 + $0x20] sm:$0xff]
    %v233 = vld [vmem:[%s227 + $0x28] sm:$0xff]
    %v234 = vld [vmem:[%s227 + $0x30] sm:$0xff]
    %v235 = vld [vmem:[%s227 + $0x38] sm:$0xff]
    %s236 = scalar_lea.vmem [#allocation8], 64
    %v237 = vld [vmem:[%s236] sm:$0xff]
    %v238 = vld [vmem:[%s236 + $0x8] sm:$0xff]
    %v239 = vld [vmem:[%s236 + $0x10] sm:$0xff]
    %v240 = vld [vmem:[%s236 + $0x18] sm:$0xff]
    %v241 = vld [vmem:[%s236 + $0x20] sm:$0xff]
    %v242 = vld [vmem:[%s236 + $0x28] sm:$0xff]
    %v243 = vld [vmem:[%s236 + $0x30] sm:$0xff]
    %v244 = vld [vmem:[%s236 + $0x38] sm:$0xff]
    %v245 = vmul.f32 %v211, %v228
    %v246 = vmul.f32 %v212, %v229
    %v247 = vmul.f32 %v213, %v230
    %v248 = vmul.f32 %v214, %v231
    %v249 = vmul.f32 %v215, %v232
    %v250 = vmul.f32 %v216, %v233
    %v251 = vmul.f32 %v217, %v234
    %v252 = vmul.f32 %v218, %v235
    %v253 = vmul.f32 %v219, %v237
    %v254 = vmul.f32 %v220, %v238
    %v255 = vmul.f32 %v221, %v239
    %v256 = vmul.f32 %v222, %v240
    %v257 = vmul.f32 %v223, %v241
    %v258 = vmul.f32 %v224, %v242
    %v259 = vmul.f32 %v225, %v243
    %v260 = vmul.f32 %v226, %v244
    %v261 = vsub.f32 %v245, %v253
    %v262 = vsub.f32 %v246, %v254
    %v263 = vsub.f32 %v247, %v255
    %v264 = vsub.f32 %v248, %v256
    %v265 = vsub.f32 %v249, %v257
    %v266 = vsub.f32 %v250, %v258
    %v267 = vsub.f32 %v251, %v259
    %v268 = vsub.f32 %v252, %v260
    %v269 = vmul.f32 %v211, %v237
    %v270 = vmul.f32 %v212, %v238
    %v271 = vmul.f32 %v213, %v239
    %v272 = vmul.f32 %v214, %v240
    %v273 = vmul.f32 %v215, %v241
    %v274 = vmul.f32 %v216, %v242
    %v275 = vmul.f32 %v217, %v243
    %v276 = vmul.f32 %v218, %v244
    %v277 = vmul.f32 %v219, %v228
    %v278 = vmul.f32 %v220, %v229
    %v279 = vmul.f32 %v221, %v230
    %v280 = vmul.f32 %v222, %v231
    %v281 = vmul.f32 %v223, %v232
    %v282 = vmul.f32 %v224, %v233
    %v283 = vmul.f32 %v225, %v234
    %v284 = vmul.f32 %v226, %v235
    %v285 = vadd.f32 %v269, %v277
    %v286 = vadd.f32 %v270, %v278
    %v287 = vadd.f32 %v271, %v279
    %v288 = vadd.f32 %v272, %v280
    %v289 = vadd.f32 %v273, %v281
    %v290 = vadd.f32 %v274, %v282
    %v291 = vadd.f32 %v275, %v283
    %v292 = vadd.f32 %v276, %v284
    %v293 = vld [vmem:[#allocation2] sm:$0xff]
    %v294 = vld [vmem:[#allocation2 + $0x8] sm:$0xff]
    %v295 = vld [vmem:[#allocation2 + $0x10] sm:$0xff]
    %v296 = vld [vmem:[#allocation2 + $0x18] sm:$0xff]
    %v297 = vld [vmem:[#allocation2 + $0x20] sm:$0xff]
    %v298 = vld [vmem:[#allocation2 + $0x28] sm:$0xff]
    %v299 = vld [vmem:[#allocation2 + $0x30] sm:$0xff]
    %v300 = vld [vmem:[#allocation2 + $0x38] sm:$0xff]
    %v301 = vmul.f32 %v293, 1.4142135
    %v302 = vmul.f32 %v294, 1.4142135
    %v303 = vmul.f32 %v295, 1.4142135
    %v304 = vmul.f32 %v296, 1.4142135
    %v305 = vmul.f32 %v297, 1.4142135
    %v306 = vmul.f32 %v298, 1.4142135
    %v307 = vmul.f32 %v299, 1.4142135
    %v308 = vmul.f32 %v300, 1.4142135
    %v309 = vld [vmem:[#allocation5] sm:$0xff]
    %v310 = vld [vmem:[#allocation5 + $0x8] sm:$0xff]
    %v311 = vld [vmem:[#allocation5 + $0x10] sm:$0xff]
    %v312 = vld [vmem:[#allocation5 + $0x18] sm:$0xff]
    %v313 = vld [vmem:[#allocation5 + $0x20] sm:$0xff]
    %v314 = vld [vmem:[#allocation5 + $0x28] sm:$0xff]
    %v315 = vld [vmem:[#allocation5 + $0x30] sm:$0xff]
    %v316 = vld [vmem:[#allocation5 + $0x38] sm:$0xff]
    %v317 = vmul.f32 %v309, 1.4142135
    %v318 = vmul.f32 %v310, 1.4142135
    %v319 = vmul.f32 %v311, 1.4142135
    %v320 = vmul.f32 %v312, 1.4142135
    %v321 = vmul.f32 %v313, 1.4142135
    %v322 = vmul.f32 %v314, 1.4142135
    %v323 = vmul.f32 %v315, 1.4142135
    %v324 = vmul.f32 %v316, 1.4142135
    %v325 = vmul.f32 %v301, %v261
    %v326 = vmul.f32 %v302, %v262
    %v327 = vmul.f32 %v303, %v263
    %v328 = vmul.f32 %v304, %v264
    %v329 = vmul.f32 %v305, %v265
    %v330 = vmul.f32 %v306, %v266
    %v331 = vmul.f32 %v307, %v267
    %v332 = vmul.f32 %v308, %v268
    %v333 = vmul.f32 %v317, %v285
    %v334 = vmul.f32 %v318, %v286
    %v335 = vmul.f32 %v319, %v287
    %v336 = vmul.f32 %v320, %v288
    %v337 = vmul.f32 %v321, %v289
    %v338 = vmul.f32 %v322, %v290
    %v339 = vmul.f32 %v323, %v291
    %v340 = vmul.f32 %v324, %v292
    %v341 = vsub.f32 %v325, %v333
    %v342 = vsub.f32 %v326, %v334
    %v343 = vsub.f32 %v327, %v335
    %v344 = vsub.f32 %v328, %v336
    %v345 = vsub.f32 %v329, %v337
    %v346 = vsub.f32 %v330, %v338
    %v347 = vsub.f32 %v331, %v339
    %v348 = vsub.f32 %v332, %v340
    %v349 = vmul.f32 %v301, %v285
    %v350 = vmul.f32 %v302, %v286
    %v351 = vmul.f32 %v303, %v287
    %v352 = vmul.f32 %v304, %v288
    %v353 = vmul.f32 %v305, %v289
    %v354 = vmul.f32 %v306, %v290
    %v355 = vmul.f32 %v307, %v291
    %v356 = vmul.f32 %v308, %v292
    %v357 = vmul.f32 %v317, %v261
    %v358 = vmul.f32 %v318, %v262
    %v359 = vmul.f32 %v319, %v263
    %v360 = vmul.f32 %v320, %v264
    %v361 = vmul.f32 %v321, %v265
    %v362 = vmul.f32 %v322, %v266
    %v363 = vmul.f32 %v323, %v267
    %v364 = vmul.f32 %v324, %v268
    %v365 = vadd.f32 %v349, %v357
    %v366 = vadd.f32 %v350, %v358
    %v367 = vadd.f32 %v351, %v359
    %v368 = vadd.f32 %v352, %v360
    %v369 = vadd.f32 %v353, %v361
    %v370 = vadd.f32 %v354, %v362
    %v371 = vadd.f32 %v355, %v363
    %v372 = vadd.f32 %v356, %v364
    %v373 = vld [vmem:[#allocation10] sm:$0xff]
    %v374 = vld [vmem:[#allocation10 + $0x8] sm:$0xff]
    %v375 = vld [vmem:[#allocation10 + $0x10] sm:$0xff]
    %v376 = vld [vmem:[#allocation10 + $0x18] sm:$0xff]
    %v377 = vld [vmem:[#allocation10 + $0x20] sm:$0xff]
    %v378 = vld [vmem:[#allocation10 + $0x28] sm:$0xff]
    %v379 = vld [vmem:[#allocation10 + $0x30] sm:$0xff]
    %v380 = vld [vmem:[#allocation10 + $0x38] sm:$0xff]
    %v381 = vld [vmem:[#allocation11] sm:$0xff]
    %v382 = vld [vmem:[#allocation11 + $0x8] sm:$0xff]
    %v383 = vld [vmem:[#allocation11 + $0x10] sm:$0xff]
    %v384 = vld [vmem:[#allocation11 + $0x18] sm:$0xff]
    %v385 = vld [vmem:[#allocation11 + $0x20] sm:$0xff]
    %v386 = vld [vmem:[#allocation11 + $0x28] sm:$0xff]
    %v387 = vld [vmem:[#allocation11 + $0x30] sm:$0xff]
    %v388 = vld [vmem:[#allocation11 + $0x38] sm:$0xff]
    %v389 = vmul.f32 %v341, %v373
    %v390 = vmul.f32 %v342, %v374
    %v391 = vmul.f32 %v343, %v375
    %v392 = vmul.f32 %v344, %v376
    %v393 = vmul.f32 %v345, %v377
    %v394 = vmul.f32 %v346, %v378
    %v395 = vmul.f32 %v347, %v379
    %v396 = vmul.f32 %v348, %v380
    %v397 = vmul.f32 %v365, %v381
    %v398 = vmul.f32 %v366, %v382
    %v399 = vmul.f32 %v367, %v383
    %v400 = vmul.f32 %v368, %v384
    %v401 = vmul.f32 %v369, %v385
    %v402 = vmul.f32 %v370, %v386
    %v403 = vmul.f32 %v371, %v387
    %v404 = vmul.f32 %v372, %v388
    %v405 = vsub.f32 %v389, %v397
    %v406 = vsub.f32 %v390, %v398
    %v407 = vsub.f32 %v391, %v399
    %v408 = vsub.f32 %v392, %v400
    %v409 = vsub.f32 %v393, %v401
    %v410 = vsub.f32 %v394, %v402
    %v411 = vsub.f32 %v395, %v403
    %v412 = vsub.f32 %v396, %v404
    %v413 = vmul.f32 %v341, %v381
    %v414 = vmul.f32 %v342, %v382
    %v415 = vmul.f32 %v343, %v383
    %v416 = vmul.f32 %v344, %v384
    %v417 = vmul.f32 %v345, %v385
    %v418 = vmul.f32 %v346, %v386
    %v419 = vmul.f32 %v347, %v387
    %v420 = vmul.f32 %v348, %v388
    %v421 = vmul.f32 %v365, %v373
    %v422 = vmul.f32 %v366, %v374
    %v423 = vmul.f32 %v367, %v375
    %v424 = vmul.f32 %v368, %v376
    %v425 = vmul.f32 %v369, %v377
    %v426 = vmul.f32 %v370, %v378
    %v427 = vmul.f32 %v371, %v379
    %v428 = vmul.f32 %v372, %v380
    %v429 = vadd.f32 %v413, %v421
    %v430 = vadd.f32 %v414, %v422
    %v431 = vadd.f32 %v415, %v423
    %v432 = vadd.f32 %v416, %v424
    %v433 = vadd.f32 %v417, %v425
    %v434 = vadd.f32 %v418, %v426
    %v435 = vadd.f32 %v419, %v427
    %v436 = vadd.f32 %v420, %v428
    %v437 = vld [vmem:[#allocation13] sm:$0xff]
    %v438 = vld [vmem:[#allocation13 + $0x8] sm:$0xff]
    %v439 = vld [vmem:[#allocation13 + $0x10] sm:$0xff]
    %v440 = vld [vmem:[#allocation13 + $0x18] sm:$0xff]
    %v441 = vld [vmem:[#allocation14] sm:$0xff]
    %v442 = vld [vmem:[#allocation14 + $0x8] sm:$0xff]
    %v443 = vld [vmem:[#allocation14 + $0x10] sm:$0xff]
    %v444 = vld [vmem:[#allocation14 + $0x18] sm:$0xff]
    %vm445 = vcmask 523264
    %v447 = vsel %vm445, %v437, 0
    %v450 = vsel %vm445, %v438, 0
    %v453 = vsel %vm445, %v439, 0
    %v456 = vsel %vm445, %v440, 0
    %458 = vmatprep.subr.mxu0 0.0
    %459 = vmatpush1.msra.mxu0 %v405
    %460 = vmatprep.subr.mxu0 0.0
    %461 = vmatpush1.msra.mxu0 %v406
    %462 = vmatprep.subr.mxu0 0.0
    %463 = vmatpush1.msra.mxu0 %v407
    %464 = vmatprep.subr.mxu0 0.0
    %465 = vmatpush1.msra.mxu0 %v408
    %466 = vmatprep.subr.mxu0 0.0
    %467 = vmatpush1.msra.mxu0 %v409
    %468 = vmatprep.subr.mxu0 0.0
    %469 = vmatpush1.msra.mxu0 %v410
    %470 = vmatprep.subr.mxu0 0.0
    %471 = vmatpush1.msra.mxu0 %v411
    %472 = vmatprep.subr.mxu0 0.0
    %473 = vmatpush1.msra.mxu0 %v412
    %474 = vmatprep.subr.mxu0 0.0
    %475 = vmatpush1.msra.mxu0 0.0
    %476 = vmatprep.subr.mxu0 0.0
    %477 = vmatpush1.msra.mxu0 0.0
    %478 = vmatprep.subr.mxu0 0.0
    %479 = vmatpush1.msra.mxu0 0.0
    %480 = vmatprep.subr.mxu0 0.0
    %481 = vmatpush1.msra.mxu0 0.0
    %482 = vmatprep.subr.mxu0 0.0
    %483 = vmatpush1.msra.mxu0 0.0
    %484 = vmatprep.subr.mxu0 0.0
    %485 = vmatpush1.msra.mxu0 0.0
    %486 = vmatprep.subr.mxu0 0.0
    %487 = vmatpush1.msra.mxu0 0.0
    %488 = vmatprep.subr.mxu0 0.0
    %489 = vmatpush1.msra.mxu0 0.0
    %490 = vmatprep.subr.mxu0 0.0
    %491 = vmatpush1.msra.mxu0 0.0
    %492 = vmatprep.subr.mxu0 0.0
    %493 = vmatpush1.msra.mxu0 0.0
    %494 = vmatprep.subr.mxu0 0.0
    %495 = vmatpush1.msra.mxu0 0.0
    %496 = vmatprep.subr.mxu0 0.0
    %497 = vmatpush1.msra.mxu0 0.0
    %498 = vmatprep.subr.mxu0 0.0
    %499 = vmatpush1.msra.mxu0 0.0
    %500 = vmatprep.subr.mxu0 0.0
    %501 = vmatpush1.msra.mxu0 0.0
    %502 = vmatprep.subr.mxu0 0.0
    %503 = vmatpush1.msra.mxu0 0.0
    %504 = vmatprep.subr.mxu0 0.0
    %505 = vmatpush1.msra.mxu0 0.0
    %506 = vmatprep.subr.mxu0 0.0
    %507 = vmatpush1.msra.mxu0 0.0
    %508 = vmatprep.subr.mxu0 0.0
    %509 = vmatpush1.msra.mxu0 0.0
    %510 = vmatprep.subr.mxu0 0.0
    %511 = vmatpush1.msra.mxu0 0.0
    %512 = vmatprep.subr.mxu0 0.0
    %513 = vmatpush1.msra.mxu0 0.0
    %514 = vmatprep.subr.mxu0 0.0
    %515 = vmatpush1.msra.mxu0 0.0
    %516 = vmatprep.subr.mxu0 0.0
    %517 = vmatpush1.msra.mxu0 0.0
    %518 = vmatprep.subr.mxu0 0.0
    %519 = vmatpush1.msra.mxu0 0.0
    %520 = vmatprep.subr.mxu0 0.0
    %521 = vmatpush1.msra.mxu0 0.0
    %522 = vmatprep.mubr.f32.mxu0 0.0
    %523 = vmatmul.mubr.f32.gmra.mrb[0].mxu0 %v447
    %v524 = vpop.f32.mrb[0].mxu0
    %v525 = vadd.f32 0.0, %v524
    %v526 = vpop.f32.mrb[0].mxu0
    %527 = vmatprep.mubr.f32.mxu0 0.0
    %528 = vmatmul.mubr.f32.gmra.mrb[0].mxu0 %v450
    %v529 = vpop.f32.mrb[0].mxu0
    %v530 = vadd.f32 0.0, %v529
    %v531 = vpop.f32.mrb[0].mxu0
    %532 = vmatprep.mubr.f32.mxu0 0.0
    %533 = vmatmul.mubr.f32.gmra.mrb[0].mxu0 %v453
    %v534 = vpop.f32.mrb[0].mxu0
    %v535 = vadd.f32 0.0, %v534
    %v536 = vpop.f32.mrb[0].mxu0
    %537 = vmatprep.mubr.f32.mxu0 0.0
    %538 = vmatmul.mubr.f32.gmra.mrb[0].mxu0 %v456
    %v539 = vpop.f32.mrb[0].mxu0
    %v540 = vadd.f32 0.0, %v539
    %v541 = vpop.f32.mrb[0].mxu0
    %542 = vdwg.mxu0
    %v544 = vsel %vm445, %v441, 0
    %v547 = vsel %vm445, %v442, 0
    %v550 = vsel %vm445, %v443, 0
    %v553 = vsel %vm445, %v444, 0
    %555 = vmatprep.subr.mxu0 0.0
    %556 = vmatpush1.msra.mxu0 %v429
    %557 = vmatprep.subr.mxu0 0.0
    %558 = vmatpush1.msra.mxu0 %v430
    %559 = vmatprep.subr.mxu0 0.0
    %560 = vmatpush1.msra.mxu0 %v431
    %561 = vmatprep.subr.mxu0 0.0
    %562 = vmatpush1.msra.mxu0 %v432
    %563 = vmatprep.subr.mxu0 0.0
    %564 = vmatpush1.msra.mxu0 %v433
    %565 = vmatprep.subr.mxu0 0.0
    %566 = vmatpush1.msra.mxu0 %v434
    %567 = vmatprep.subr.mxu0 0.0
    %568 = vmatpush1.msra.mxu0 %v435
    %569 = vmatprep.subr.mxu0 0.0
    %570 = vmatpush1.msra.mxu0 %v436
    %571 = vmatprep.subr.mxu0 0.0
    %572 = vmatpush1.msra.mxu0 0.0
    %573 = vmatprep.subr.mxu0 0.0
    %574 = vmatpush1.msra.mxu0 0.0
    %575 = vmatprep.subr.mxu0 0.0
    %576 = vmatpush1.msra.mxu0 0.0
    %577 = vmatprep.subr.mxu0 0.0
    %578 = vmatpush1.msra.mxu0 0.0
    %579 = vmatprep.subr.mxu0 0.0
    %580 = vmatpush1.msra.mxu0 0.0
    %581 = vmatprep.subr.mxu0 0.0
    %582 = vmatpush1.msra.mxu0 0.0
    %583 = vmatprep.subr.mxu0 0.0
    %584 = vmatpush1.msra.mxu0 0.0
    %585 = vmatprep.subr.mxu0 0.0
    %586 = vmatpush1.msra.mxu0 0.0
    %587 = vmatprep.subr.mxu0 0.0
    %588 = vmatpush1.msra.mxu0 0.0
    %589 = vmatprep.subr.mxu0 0.0
    %590 = vmatpush1.msra.mxu0 0.0
    %591 = vmatprep.subr.mxu0 0.0
    %592 = vmatpush1.msra.mxu0 0.0
    %593 = vmatprep.subr.mxu0 0.0
    %594 = vmatpush1.msra.mxu0 0.0
    %595 = vmatprep.subr.mxu0 0.0
    %596 = vmatpush1.msra.mxu0 0.0
    %597 = vmatprep.subr.mxu0 0.0
    %598 = vmatpush1.msra.mxu0 0.0
    %599 = vmatprep.subr.mxu0 0.0
    %600 = vmatpush1.msra.mxu0 0.0
    %601 = vmatprep.subr.mxu0 0.0
    %602 = vmatpush1.msra.mxu0 0.0
    %603 = vmatprep.subr.mxu0 0.0
    %604 = vmatpush1.msra.mxu0 0.0
    %605 = vmatprep.subr.mxu0 0.0
    %606 = vmatpush1.msra.mxu0 0.0
    %607 = vmatprep.subr.mxu0 0.0
    %608 = vmatpush1.msra.mxu0 0.0
    %609 = vmatprep.subr.mxu0 0.0
    %610 = vmatpush1.msra.mxu0 0.0
    %611 = vmatprep.subr.mxu0 0.0
    %612 = vmatpush1.msra.mxu0 0.0
    %613 = vmatprep.subr.mxu0 0.0
    %614 = vmatpush1.msra.mxu0 0.0
    %615 = vmatprep.subr.mxu0 0.0
    %616 = vmatpush1.msra.mxu0 0.0
    %617 = vmatprep.subr.mxu0 0.0
    %618 = vmatpush1.msra.mxu0 0.0
    %619 = vmatprep.mubr.f32.mxu0 0.0
    %620 = vmatmul.mubr.f32.gmra.mrb[0].mxu0 %v544
    %v621 = vpop.f32.mrb[0].mxu0
    %v622 = vadd.f32 0.0, %v621
    %v623 = vpop.f32.mrb[0].mxu0
    %624 = vmatprep.mubr.f32.mxu0 0.0
    %625 = vmatmul.mubr.f32.gmra.mrb[0].mxu0 %v547
    %v626 = vpop.f32.mrb[0].mxu0
    %v627 = vadd.f32 0.0, %v626
    %v628 = vpop.f32.mrb[0].mxu0
    %629 = vmatprep.mubr.f32.mxu0 0.0
    %630 = vmatmul.mubr.f32.gmra.mrb[0].mxu0 %v550
    %v631 = vpop.f32.mrb[0].mxu0
    %v632 = vadd.f32 0.0, %v631
    %v633 = vpop.f32.mrb[0].mxu0
    %634 = vmatprep.mubr.f32.mxu0 0.0
    %635 = vmatmul.mubr.f32.gmra.mrb[0].mxu0 %v553
    %v636 = vpop.f32.mrb[0].mxu0
    %v637 = vadd.f32 0.0, %v636
    %v638 = vpop.f32.mrb[0].mxu0
    %639 = vdwg.mxu0
    %v640 = vsub.f32 %v525, %v622
    %v641 = vsub.f32 %v530, %v627
    %v642 = vsub.f32 %v535, %v632
    %v643 = vsub.f32 %v540, %v637
    %644 = vmatprep.subr.mxu0 0.0
    %645 = vmatpush1.msra.mxu0 %v405
    %646 = vmatprep.subr.mxu0 0.0
    %647 = vmatpush1.msra.mxu0 %v406
    %648 = vmatprep.subr.mxu0 0.0
    %649 = vmatpush1.msra.mxu0 %v407
    %650 = vmatprep.subr.mxu0 0.0
    %651 = vmatpush1.msra.mxu0 %v408
    %652 = vmatprep.subr.mxu0 0.0
    %653 = vmatpush1.msra.mxu0 %v409
    %654 = vmatprep.subr.mxu0 0.0
    %655 = vmatpush1.msra.mxu0 %v410
    %656 = vmatprep.subr.mxu0 0.0
    %657 = vmatpush1.msra.mxu0 %v411
    %658 = vmatprep.subr.mxu0 0.0
    %659 = vmatpush1.msra.mxu0 %v412
    %660 = vmatprep.subr.mxu0 0.0
    %661 = vmatpush1.msra.mxu0 0.0
    %662 = vmatprep.subr.mxu0 0.0
    %663 = vmatpush1.msra.mxu0 0.0
    %664 = vmatprep.subr.mxu0 0.0
    %665 = vmatpush1.msra.mxu0 0.0
    %666 = vmatprep.subr.mxu0 0.0
    %667 = vmatpush1.msra.mxu0 0.0
    %668 = vmatprep.subr.mxu0 0.0
    %669 = vmatpush1.msra.mxu0 0.0
    %670 = vmatprep.subr.mxu0 0.0
    %671 = vmatpush1.msra.mxu0 0.0
    %672 = vmatprep.subr.mxu0 0.0
    %673 = vmatpush1.msra.mxu0 0.0
    %674 = vmatprep.subr.mxu0 0.0
    %675 = vmatpush1.msra.mxu0 0.0
    %676 = vmatprep.subr.mxu0 0.0
    %677 = vmatpush1.msra.mxu0 0.0
    %678 = vmatprep.subr.mxu0 0.0
    %679 = vmatpush1.msra.mxu0 0.0
    %680 = vmatprep.subr.mxu0 0.0
    %681 = vmatpush1.msra.mxu0 0.0
    %682 = vmatprep.subr.mxu0 0.0
    %683 = vmatpush1.msra.mxu0 0.0
    %684 = vmatprep.subr.mxu0 0.0
    %685 = vmatpush1.msra.mxu0 0.0
    %686 = vmatprep.subr.mxu0 0.0
    %687 = vmatpush1.msra.mxu0 0.0
    %688 = vmatprep.subr.mxu0 0.0
    %689 = vmatpush1.msra.mxu0 0.0
    %690 = vmatprep.subr.mxu0 0.0
    %691 = vmatpush1.msra.mxu0 0.0
    %692 = vmatprep.subr.mxu0 0.0
    %693 = vmatpush1.msra.mxu0 0.0
    %694 = vmatprep.subr.mxu0 0.0
    %695 = vmatpush1.msra.mxu0 0.0
    %696 = vmatprep.subr.mxu0 0.0
    %697 = vmatpush1.msra.mxu0 0.0
    %698 = vmatprep.subr.mxu0 0.0
    %699 = vmatpush1.msra.mxu0 0.0
    %700 = vmatprep.subr.mxu0 0.0
    %701 = vmatpush1.msra.mxu0 0.0
    %702 = vmatprep.subr.mxu0 0.0
    %703 = vmatpush1.msra.mxu0 0.0
    %704 = vmatprep.subr.mxu0 0.0
    %705 = vmatpush1.msra.mxu0 0.0
    %706 = vmatprep.subr.mxu0 0.0
    %707 = vmatpush1.msra.mxu0 0.0
    %708 = vmatprep.mubr.f32.mxu0 0.0
    %709 = vmatmul.mubr.f32.gmra.mrb[0].mxu0 %v544
    %v710 = vpop.f32.mrb[0].mxu0
    %v711 = vadd.f32 0.0, %v710
    %v712 = vpop.f32.mrb[0].mxu0
    %713 = vmatprep.mubr.f32.mxu0 0.0
    %714 = vmatmul.mubr.f32.gmra.mrb[0].mxu0 %v547
    %v715 = vpop.f32.mrb[0].mxu0
    %v716 = vadd.f32 0.0, %v715
    %v717 = vpop.f32.mrb[0].mxu0
    %718 = vmatprep.mubr.f32.mxu0 0.0
    %719 = vmatmul.mubr.f32.gmra.mrb[0].mxu0 %v550
    %v720 = vpop.f32.mrb[0].mxu0
    %v721 = vadd.f32 0.0, %v720
    %v722 = vpop.f32.mrb[0].mxu0
    %723 = vmatprep.mubr.f32.mxu0 0.0
    %724 = vmatmul.mubr.f32.gmra.mrb[0].mxu0 %v553
    %v725 = vpop.f32.mrb[0].mxu0
    %v726 = vadd.f32 0.0, %v725
    %v727 = vpop.f32.mrb[0].mxu0
    %728 = vdwg.mxu0
    %729 = vmatprep.subr.mxu0 0.0
    %730 = vmatpush1.msra.mxu0 %v429
    %731 = vmatprep.subr.mxu0 0.0
    %732 = vmatpush1.msra.mxu0 %v430
    %733 = vmatprep.subr.mxu0 0.0
    %734 = vmatpush1.msra.mxu0 %v431
    %735 = vmatprep.subr.mxu0 0.0
    %736 = vmatpush1.msra.mxu0 %v432
    %737 = vmatprep.subr.mxu0 0.0
    %738 = vmatpush1.msra.mxu0 %v433
    %739 = vmatprep.subr.mxu0 0.0
    %740 = vmatpush1.msra.mxu0 %v434
    %741 = vmatprep.subr.mxu0 0.0
    %742 = vmatpush1.msra.mxu0 %v435
    %743 = vmatprep.subr.mxu0 0.0
    %744 = vmatpush1.msra.mxu0 %v436
    %745 = vmatprep.subr.mxu0 0.0
    %746 = vmatpush1.msra.mxu0 0.0
    %747 = vmatprep.subr.mxu0 0.0
    %748 = vmatpush1.msra.mxu0 0.0
    %749 = vmatprep.subr.mxu0 0.0
    %750 = vmatpush1.msra.mxu0 0.0
    %751 = vmatprep.subr.mxu0 0.0
    %752 = vmatpush1.msra.mxu0 0.0
    %753 = vmatprep.subr.mxu0 0.0
    %754 = vmatpush1.msra.mxu0 0.0
    %755 = vmatprep.subr.mxu0 0.0
    %756 = vmatpush1.msra.mxu0 0.0
    %757 = vmatprep.subr.mxu0 0.0
    %758 = vmatpush1.msra.mxu0 0.0
    %759 = vmatprep.subr.mxu0 0.0
    %760 = vmatpush1.msra.mxu0 0.0
    %761 = vmatprep.subr.mxu0 0.0
    %762 = vmatpush1.msra.mxu0 0.0
    %763 = vmatprep.subr.mxu0 0.0
    %764 = vmatpush1.msra.mxu0 0.0
    %765 = vmatprep.subr.mxu0 0.0
    %766 = vmatpush1.msra.mxu0 0.0
    %767 = vmatprep.subr.mxu0 0.0
    %768 = vmatpush1.msra.mxu0 0.0
    %769 = vmatprep.subr.mxu0 0.0
    %770 = vmatpush1.msra.mxu0 0.0
    %771 = vmatprep.subr.mxu0 0.0
    %772 = vmatpush1.msra.mxu0 0.0
    %773 = vmatprep.subr.mxu0 0.0
    %774 = vmatpush1.msra.mxu0 0.0
    %775 = vmatprep.subr.mxu0 0.0
    %776 = vmatpush1.msra.mxu0 0.0
    %777 = vmatprep.subr.mxu0 0.0
    %778 = vmatpush1.msra.mxu0 0.0
    %779 = vmatprep.subr.mxu0 0.0
    %780 = vmatpush1.msra.mxu0 0.0
    %781 = vmatprep.subr.mxu0 0.0
    %782 = vmatpush1.msra.mxu0 0.0
    %783 = vmatprep.subr.mxu0 0.0
    %784 = vmatpush1.msra.mxu0 0.0
    %785 = vmatprep.subr.mxu0 0.0
    %786 = vmatpush1.msra.mxu0 0.0
    %787 = vmatprep.subr.mxu0 0.0
    %788 = vmatpush1.msra.mxu0 0.0
    %789 = vmatprep.subr.mxu0 0.0
    %790 = vmatpush1.msra.mxu0 0.0
    %791 = vmatprep.subr.mxu0 0.0
    %792 = vmatpush1.msra.mxu0 0.0
    %793 = vmatprep.mubr.f32.mxu0 0.0
    %794 = vmatmul.mubr.f32.gmra.mrb[0].mxu0 %v447
    %v795 = vpop.f32.mrb[0].mxu0
    %v796 = vadd.f32 %v711, %v795
    %v797 = vpop.f32.mrb[0].mxu0
    %798 = vmatprep.mubr.f32.mxu0 0.0
    %799 = vmatmul.mubr.f32.gmra.mrb[0].mxu0 %v450
    %v800 = vpop.f32.mrb[0].mxu0
    %v801 = vadd.f32 %v716, %v800
    %v802 = vpop.f32.mrb[0].mxu0
    %803 = vmatprep.mubr.f32.mxu0 0.0
    %804 = vmatmul.mubr.f32.gmra.mrb[0].mxu0 %v453
    %v805 = vpop.f32.mrb[0].mxu0
    %v806 = vadd.f32 %v721, %v805
    %v807 = vpop.f32.mrb[0].mxu0
    %808 = vmatprep.mubr.f32.mxu0 0.0
    %809 = vmatmul.mubr.f32.gmra.mrb[0].mxu0 %v456
    %v810 = vpop.f32.mrb[0].mxu0
    %v811 = vadd.f32 %v726, %v810
    %v812 = vpop.f32.mrb[0].mxu0
    %813 = vdwg.mxu0
    %v814 = vld [vmem:[#allocation16] sm:$0xff]
    %v815 = vld [vmem:[#allocation16 + $0x8] sm:$0xff]
    %v816 = vld [vmem:[#allocation16 + $0x10] sm:$0xff]
    %v817 = vld [vmem:[#allocation16 + $0x18] sm:$0xff]
    %v818 = vld [vmem:[#allocation16 + $0x20] sm:$0xff]
    %v819 = vld [vmem:[#allocation16 + $0x28] sm:$0xff]
    %v820 = vld [vmem:[#allocation16 + $0x30] sm:$0xff]
    %v821 = vld [vmem:[#allocation16 + $0x38] sm:$0xff]
    %v822 = vld [vmem:[#allocation16 + $0x40] sm:$0xff]
    %v823 = vld [vmem:[#allocation16 + $0x48] sm:$0xff]
    %v824 = vld [vmem:[#allocation16 + $0x50] sm:$0xff]
    %v825 = vld [vmem:[#allocation16 + $0x58] sm:$0xff]
    %v826 = vld [vmem:[#allocation16 + $0x60] sm:$0xff]
    %v827 = vld [vmem:[#allocation16 + $0x68] sm:$0xff]
    %v828 = vld [vmem:[#allocation16 + $0x70] sm:$0xff]
    %v829 = vld [vmem:[#allocation16 + $0x78] sm:$0xff]
    %v830 = vld [vmem:[#allocation16 + $0x80] sm:$0xff]
    %v831 = vld [vmem:[#allocation16 + $0x88] sm:$0xff]
    %v832 = vld [vmem:[#allocation16 + $0x90] sm:$0xff]
    %v833 = vld [vmem:[#allocation16 + $0x98] sm:$0xff]
    %v834 = vld [vmem:[#allocation16 + $0xa0] sm:$0xff]
    %v835 = vld [vmem:[#allocation16 + $0xa8] sm:$0xff]
    %v836 = vld [vmem:[#allocation16 + $0xb0] sm:$0xff]
    %v837 = vld [vmem:[#allocation16 + $0xb8] sm:$0xff]
    %v838 = vld [vmem:[#allocation16 + $0xc0] sm:$0xff]
    %v839 = vld [vmem:[#allocation16 + $0xc8] sm:$0xff]
    %v840 = vld [vmem:[#allocation16 + $0xd0] sm:$0xff]
    %v841 = vld [vmem:[#allocation16 + $0xd8] sm:$0xff]
    %v842 = vld [vmem:[#allocation16 + $0xe0] sm:$0xff]
    %v843 = vld [vmem:[#allocation16 + $0xe8] sm:$0xff]
    %v844 = vld [vmem:[#allocation16 + $0xf0] sm:$0xff]
    %v845 = vld [vmem:[#allocation16 + $0xf8] sm:$0xff]
    %v846 = vld [vmem:[#allocation17] sm:$0xff]
    %v847 = vld [vmem:[#allocation17 + $0x8] sm:$0xff]
    %v848 = vld [vmem:[#allocation17 + $0x10] sm:$0xff]
    %v849 = vld [vmem:[#allocation17 + $0x18] sm:$0xff]
    %v850 = vld [vmem:[#allocation17 + $0x20] sm:$0xff]
    %v851 = vld [vmem:[#allocation17 + $0x28] sm:$0xff]
    %v852 = vld [vmem:[#allocation17 + $0x30] sm:$0xff]
    %v853 = vld [vmem:[#allocation17 + $0x38] sm:$0xff]
    %v854 = vld [vmem:[#allocation17 + $0x40] sm:$0xff]
    %v855 = vld [vmem:[#allocation17 + $0x48] sm:$0xff]
    %v856 = vld [vmem:[#allocation17 + $0x50] sm:$0xff]
    %v857 = vld [vmem:[#allocation17 + $0x58] sm:$0xff]
    %v858 = vld [vmem:[#allocation17 + $0x60] sm:$0xff]
    %v859 = vld [vmem:[#allocation17 + $0x68] sm:$0xff]
    %v860 = vld [vmem:[#allocation17 + $0x70] sm:$0xff]
    %v861 = vld [vmem:[#allocation17 + $0x78] sm:$0xff]
    %v862 = vld [vmem:[#allocation17 + $0x80] sm:$0xff]
    %v863 = vld [vmem:[#allocation17 + $0x88] sm:$0xff]
    %v864 = vld [vmem:[#allocation17 + $0x90] sm:$0xff]
    %v865 = vld [vmem:[#allocation17 + $0x98] sm:$0xff]
    %v866 = vld [vmem:[#allocation17 + $0xa0] sm:$0xff]
    %v867 = vld [vmem:[#allocation17 + $0xa8] sm:$0xff]
    %v868 = vld [vmem:[#allocation17 + $0xb0] sm:$0xff]
    %v869 = vld [vmem:[#allocation17 + $0xb8] sm:$0xff]
    %v870 = vld [vmem:[#allocation17 + $0xc0] sm:$0xff]
    %v871 = vld [vmem:[#allocation17 + $0xc8] sm:$0xff]
    %v872 = vld [vmem:[#allocation17 + $0xd0] sm:$0xff]
    %v873 = vld [vmem:[#allocation17 + $0xd8] sm:$0xff]
    %v874 = vld [vmem:[#allocation17 + $0xe0] sm:$0xff]
    %v875 = vld [vmem:[#allocation17 + $0xe8] sm:$0xff]
    %v876 = vld [vmem:[#allocation17 + $0xf0] sm:$0xff]
    %v877 = vld [vmem:[#allocation17 + $0xf8] sm:$0xff]
    %878 = vmatprep.subr.mxu0 %v815
    %879 = vmatpush1.msra.mxu0 %v814
    %880 = vmatprep.subr.mxu0 %v817
    %881 = vmatpush1.msra.mxu0 %v816
    %882 = vmatprep.subr.mxu0 %v819
    %883 = vmatpush1.msra.mxu0 %v818
    %884 = vmatprep.subr.mxu0 %v821
    %885 = vmatpush1.msra.mxu0 %v820
    %886 = vmatprep.subr.mxu0 %v823
    %887 = vmatpush1.msra.mxu0 %v822
    %888 = vmatprep.subr.mxu0 %v825
    %889 = vmatpush1.msra.mxu0 %v824
    %890 = vmatprep.subr.mxu0 %v827
    %891 = vmatpush1.msra.mxu0 %v826
    %892 = vmatprep.subr.mxu0 %v829
    %893 = vmatpush1.msra.mxu0 %v828
    %894 = vmatprep.subr.mxu0 %v831
    %895 = vmatpush1.msra.mxu0 %v830
    %896 = vmatprep.subr.mxu0 %v833
    %897 = vmatpush1.msra.mxu0 %v832
    %898 = vmatprep.subr.mxu0 %v835
    %899 = vmatpush1.msra.mxu0 %v834
    %900 = vmatprep.subr.mxu0 %v837
    %901 = vmatpush1.msra.mxu0 %v836
    %902 = vmatprep.subr.mxu0 %v839
    %903 = vmatpush1.msra.mxu0 %v838
    %904 = vmatprep.subr.mxu0 %v841
    %905 = vmatpush1.msra.mxu0 %v840
    %906 = vmatprep.subr.mxu0 %v843
    %907 = vmatpush1.msra.mxu0 %v842
    %908 = vmatprep.subr.mxu0 %v845
    %909 = vmatpush1.msra.mxu0 %v844
    %910 = vmatprep.subr.mxu0 0.0
    %911 = vmatpush1.msra.mxu0 0.0
    %912 = vmatprep.subr.mxu0 0.0
    %913 = vmatpush1.msra.mxu0 0.0
    %914 = vmatprep.subr.mxu0 0.0
    %915 = vmatpush1.msra.mxu0 0.0
    %916 = vmatprep.subr.mxu0 0.0
    %917 = vmatpush1.msra.mxu0 0.0
    %918 = vmatprep.subr.mxu0 0.0
    %919 = vmatpush1.msra.mxu0 0.0
    %920 = vmatprep.subr.mxu0 0.0
    %921 = vmatpush1.msra.mxu0 0.0
    %922 = vmatprep.subr.mxu0 0.0
    %923 = vmatpush1.msra.mxu0 0.0
    %924 = vmatprep.subr.mxu0 0.0
    %925 = vmatpush1.msra.mxu0 0.0
    %926 = vmatprep.subr.mxu0 0.0
    %927 = vmatpush1.msra.mxu0 0.0
    %928 = vmatprep.subr.mxu0 0.0
    %929 = vmatpush1.msra.mxu0 0.0
    %930 = vmatprep.subr.mxu0 0.0
    %931 = vmatpush1.msra.mxu0 0.0
    %932 = vmatprep.subr.mxu0 0.0
    %933 = vmatpush1.msra.mxu0 0.0
    %934 = vmatprep.subr.mxu0 0.0
    %935 = vmatpush1.msra.mxu0 0.0
    %936 = vmatprep.subr.mxu0 0.0
    %937 = vmatpush1.msra.mxu0 0.0
    %938 = vmatprep.subr.mxu0 0.0
    %939 = vmatpush1.msra.mxu0 0.0
    %940 = vmatprep.subr.mxu0 0.0
    %941 = vmatpush1.msra.mxu0 0.0
    %942 = vmatprep.mubr.f32.mxu0 0.0
    %943 = vmatmul.mubr.f32.gmra.mrb[0].mxu0 %v640
    %v944 = vpop.f32.mrb[0].mxu0
    %v945 = vadd.f32 0.0, %v944
    %v946 = vpop.f32.mrb[0].mxu0
    %v947 = vadd.f32 0.0, %v946
    %948 = vmatprep.mubr.f32.mxu0 0.0
    %949 = vmatmul.mubr.f32.gmra.mrb[0].mxu0 %v641
    %v950 = vpop.f32.mrb[0].mxu0
    %v951 = vadd.f32 0.0, %v950
    %v952 = vpop.f32.mrb[0].mxu0
    %v953 = vadd.f32 0.0, %v952
    %954 = vmatprep.mubr.f32.mxu0 0.0
    %955 = vmatmul.mubr.f32.gmra.mrb[0].mxu0 %v642
    %v956 = vpop.f32.mrb[0].mxu0
    %v957 = vadd.f32 0.0, %v956
    %v958 = vpop.f32.mrb[0].mxu0
    %v959 = vadd.f32 0.0, %v958
    %960 = vmatprep.mubr.f32.mxu0 0.0
    %961 = vmatmul.mubr.f32.gmra.mrb[0].mxu0 %v643
    %v962 = vpop.f32.mrb[0].mxu0
    %v963 = vadd.f32 0.0, %v962
    %v964 = vpop.f32.mrb[0].mxu0
    %v965 = vadd.f32 0.0, %v964
    %966 = vdwg.mxu0
    %967 = vmatprep.subr.mxu0 %v847
    %968 = vmatpush1.msra.mxu0 %v846
    %969 = vmatprep.subr.mxu0 %v849
    %970 = vmatpush1.msra.mxu0 %v848
    %971 = vmatprep.subr.mxu0 %v851
    %972 = vmatpush1.msra.mxu0 %v850
    %973 = vmatprep.subr.mxu0 %v853
    %974 = vmatpush1.msra.mxu0 %v852
    %975 = vmatprep.subr.mxu0 %v855
    %976 = vmatpush1.msra.mxu0 %v854
    %977 = vmatprep.subr.mxu0 %v857
    %978 = vmatpush1.msra.mxu0 %v856
    %979 = vmatprep.subr.mxu0 %v859
    %980 = vmatpush1.msra.mxu0 %v858
    %981 = vmatprep.subr.mxu0 %v861
    %982 = vmatpush1.msra.mxu0 %v860
    %983 = vmatprep.subr.mxu0 %v863
    %984 = vmatpush1.msra.mxu0 %v862
    %985 = vmatprep.subr.mxu0 %v865
    %986 = vmatpush1.msra.mxu0 %v864
    %987 = vmatprep.subr.mxu0 %v867
    %988 = vmatpush1.msra.mxu0 %v866
    %989 = vmatprep.subr.mxu0 %v869
    %990 = vmatpush1.msra.mxu0 %v868
    %991 = vmatprep.subr.mxu0 %v871
    %992 = vmatpush1.msra.mxu0 %v870
    %993 = vmatprep.subr.mxu0 %v873
    %994 = vmatpush1.msra.mxu0 %v872
    %995 = vmatprep.subr.mxu0 %v875
    %996 = vmatpush1.msra.mxu0 %v874
    %997 = vmatprep.subr.mxu0 %v877
    %998 = vmatpush1.msra.mxu0 %v876
    %999 = vmatprep.subr.mxu0 0.0
    %1000 = vmatpush1.msra.mxu0 0.0
    %1001 = vmatprep.subr.mxu0 0.0
    %1002 = vmatpush1.msra.mxu0 0.0
    %1003 = vmatprep.subr.mxu0 0.0
    %1004 = vmatpush1.msra.mxu0 0.0
    %1005 = vmatprep.subr.mxu0 0.0
    %1006 = vmatpush1.msra.mxu0 0.0
    %1007 = vmatprep.subr.mxu0 0.0
    %1008 = vmatpush1.msra.mxu0 0.0
    %1009 = vmatprep.subr.mxu0 0.0
    %1010 = vmatpush1.msra.mxu0 0.0
    %1011 = vmatprep.subr.mxu0 0.0
    %1012 = vmatpush1.msra.mxu0 0.0
    %1013 = vmatprep.subr.mxu0 0.0
    %1014 = vmatpush1.msra.mxu0 0.0
    %1015 = vmatprep.subr.mxu0 0.0
    %1016 = vmatpush1.msra.mxu0 0.0
    %1017 = vmatprep.subr.mxu0 0.0
    %1018 = vmatpush1.msra.mxu0 0.0
    %1019 = vmatprep.subr.mxu0 0.0
    %1020 = vmatpush1.msra.mxu0 0.0
    %1021 = vmatprep.subr.mxu0 0.0
    %1022 = vmatpush1.msra.mxu0 0.0
    %1023 = vmatprep.subr.mxu0 0.0
    %1024 = vmatpush1.msra.mxu0 0.0
    %1025 = vmatprep.subr.mxu0 0.0
    %1026 = vmatpush1.msra.mxu0 0.0
    %1027 = vmatprep.subr.mxu0 0.0
    %1028 = vmatpush1.msra.mxu0 0.0
    %1029 = vmatprep.subr.mxu0 0.0
    %1030 = vmatpush1.msra.mxu0 0.0
    %1031 = vmatprep.mubr.f32.mxu0 0.0
    %1032 = vmatmul.mubr.f32.gmra.mrb[0].mxu0 %v796
    %v1033 = vpop.f32.mrb[0].mxu0
    %v1034 = vadd.f32 0.0, %v1033
    %v1035 = vpop.f32.mrb[0].mxu0
    %v1036 = vadd.f32 0.0, %v1035
    %1037 = vmatprep.mubr.f32.mxu0 0.0
    %1038 = vmatmul.mubr.f32.gmra.mrb[0].mxu0 %v801
    %v1039 = vpop.f32.mrb[0].mxu0
    %v1040 = vadd.f32 0.0, %v1039
    %v1041 = vpop.f32.mrb[0].mxu0
    %v1042 = vadd.f32 0.0, %v1041
    %1043 = vmatprep.mubr.f32.mxu0 0.0
    %1044 = vmatmul.mubr.f32.gmra.mrb[0].mxu0 %v806
    %v1045 = vpop.f32.mrb[0].mxu0
    %v1046 = vadd.f32 0.0, %v1045
    %v1047 = vpop.f32.mrb[0].mxu0
    %v1048 = vadd.f32 0.0, %v1047
    %1049 = vmatprep.mubr.f32.mxu0 0.0
    %1050 = vmatmul.mubr.f32.gmra.mrb[0].mxu0 %v811
    %v1051 = vpop.f32.mrb[0].mxu0
    %v1052 = vadd.f32 0.0, %v1051
    %v1053 = vpop.f32.mrb[0].mxu0
    %v1054 = vadd.f32 0.0, %v1053
    %1055 = vdwg.mxu0
    %v1056 = vsub.f32 %v945, %v1034
    %v1057 = vsub.f32 %v947, %v1036
    %v1058 = vsub.f32 %v951, %v1040
    %v1059 = vsub.f32 %v953, %v1042
    %v1060 = vsub.f32 %v957, %v1046
    %v1061 = vsub.f32 %v959, %v1048
    %v1062 = vsub.f32 %v963, %v1052
    %v1063 = vsub.f32 %v965, %v1054
    %1064 = vmatprep.subr.mxu0 %v815
    %1065 = vmatpush1.msra.mxu0 %v814
    %1066 = vmatprep.subr.mxu0 %v817
    %1067 = vmatpush1.msra.mxu0 %v816
    %1068 = vmatprep.subr.mxu0 %v819
    %1069 = vmatpush1.msra.mxu0 %v818
    %1070 = vmatprep.subr.mxu0 %v821
    %1071 = vmatpush1.msra.mxu0 %v820
    %1072 = vmatprep.subr.mxu0 %v823
    %1073 = vmatpush1.msra.mxu0 %v822
    %1074 = vmatprep.subr.mxu0 %v825
    %1075 = vmatpush1.msra.mxu0 %v824
    %1076 = vmatprep.subr.mxu0 %v827
    %1077 = vmatpush1.msra.mxu0 %v826
    %1078 = vmatprep.subr.mxu0 %v829
    %1079 = vmatpush1.msra.mxu0 %v828
    %1080 = vmatprep.subr.mxu0 %v831
    %1081 = vmatpush1.msra.mxu0 %v830
    %1082 = vmatprep.subr.mxu0 %v833
    %1083 = vmatpush1.msra.mxu0 %v832
    %1084 = vmatprep.subr.mxu0 %v835
    %1085 = vmatpush1.msra.mxu0 %v834
    %1086 = vmatprep.subr.mxu0 %v837
    %1087 = vmatpush1.msra.mxu0 %v836
    %1088 = vmatprep.subr.mxu0 %v839
    %1089 = vmatpush1.msra.mxu0 %v838
    %1090 = vmatprep.subr.mxu0 %v841
    %1091 = vmatpush1.msra.mxu0 %v840
    %1092 = vmatprep.subr.mxu0 %v843
    %1093 = vmatpush1.msra.mxu0 %v842
    %1094 = vmatprep.subr.mxu0 %v845
    %1095 = vmatpush1.msra.mxu0 %v844
    %1096 = vmatprep.subr.mxu0 0.0
    %1097 = vmatpush1.msra.mxu0 0.0
    %1098 = vmatprep.subr.mxu0 0.0
    %1099 = vmatpush1.msra.mxu0 0.0
    %1100 = vmatprep.subr.mxu0 0.0
    %1101 = vmatpush1.msra.mxu0 0.0
    %1102 = vmatprep.subr.mxu0 0.0
    %1103 = vmatpush1.msra.mxu0 0.0
    %1104 = vmatprep.subr.mxu0 0.0
    %1105 = vmatpush1.msra.mxu0 0.0
    %1106 = vmatprep.subr.mxu0 0.0
    %1107 = vmatpush1.msra.mxu0 0.0
    %1108 = vmatprep.subr.mxu0 0.0
    %1109 = vmatpush1.msra.mxu0 0.0
    %1110 = vmatprep.subr.mxu0 0.0
    %1111 = vmatpush1.msra.mxu0 0.0
    %1112 = vmatprep.subr.mxu0 0.0
    %1113 = vmatpush1.msra.mxu0 0.0
    %1114 = vmatprep.subr.mxu0 0.0
    %1115 = vmatpush1.msra.mxu0 0.0
    %1116 = vmatprep.subr.mxu0 0.0
    %1117 = vmatpush1.msra.mxu0 0.0
    %1118 = vmatprep.subr.mxu0 0.0
    %1119 = vmatpush1.msra.mxu0 0.0
    %1120 = vmatprep.subr.mxu0 0.0
    %1121 = vmatpush1.msra.mxu0 0.0
    %1122 = vmatprep.subr.mxu0 0.0
    %1123 = vmatpush1.msra.mxu0 0.0
    %1124 = vmatprep.subr.mxu0 0.0
    %1125 = vmatpush1.msra.mxu0 0.0
    %1126 = vmatprep.subr.mxu0 0.0
    %1127 = vmatpush1.msra.mxu0 0.0
    %1128 = vmatprep.mubr.f32.mxu0 0.0
    %1129 = vmatmul.mubr.f32.gmra.mrb[0].mxu0 %v796
    %v1130 = vpop.f32.mrb[0].mxu0
    %v1131 = vadd.f32 0.0, %v1130
    %v1132 = vpop.f32.mrb[0].mxu0
    %v1133 = vadd.f32 0.0, %v1132
    %1134 = vmatprep.mubr.f32.mxu0 0.0
    %1135 = vmatmul.mubr.f32.gmra.mrb[0].mxu0 %v801
    %v1136 = vpop.f32.mrb[0].mxu0
    %v1137 = vadd.f32 0.0, %v1136
    %v1138 = vpop.f32.mrb[0].mxu0
    %v1139 = vadd.f32 0.0, %v1138
    %1140 = vmatprep.mubr.f32.mxu0 0.0
    %1141 = vmatmul.mubr.f32.gmra.mrb[0].mxu0 %v806
    %v1142 = vpop.f32.mrb[0].mxu0
    %v1143 = vadd.f32 0.0, %v1142
    %v1144 = vpop.f32.mrb[0].mxu0
    %v1145 = vadd.f32 0.0, %v1144
    %1146 = vmatprep.mubr.f32.mxu0 0.0
    %1147 = vmatmul.mubr.f32.gmra.mrb[0].mxu0 %v811
    %v1148 = vpop.f32.mrb[0].mxu0
    %v1149 = vadd.f32 0.0, %v1148
    %v1150 = vpop.f32.mrb[0].mxu0
    %v1151 = vadd.f32 0.0, %v1150
    %1152 = vdwg.mxu0
    %1153 = vmatprep.subr.mxu0 %v847
    %1154 = vmatpush1.msra.mxu0 %v846
    %1155 = vmatprep.subr.mxu0 %v849
    %1156 = vmatpush1.msra.mxu0 %v848
    %1157 = vmatprep.subr.mxu0 %v851
    %1158 = vmatpush1.msra.mxu0 %v850
    %1159 = vmatprep.subr.mxu0 %v853
    %1160 = vmatpush1.msra.mxu0 %v852
    %1161 = vmatprep.subr.mxu0 %v855
    %1162 = vmatpush1.msra.mxu0 %v854
    %1163 = vmatprep.subr.mxu0 %v857
    %1164 = vmatpush1.msra.mxu0 %v856
    %1165 = vmatprep.subr.mxu0 %v859
    %1166 = vmatpush1.msra.mxu0 %v858
    %1167 = vmatprep.subr.mxu0 %v861
    %1168 = vmatpush1.msra.mxu0 %v860
    %1169 = vmatprep.subr.mxu0 %v863
    %1170 = vmatpush1.msra.mxu0 %v862
    %1171 = vmatprep.subr.mxu0 %v865
    %1172 = vmatpush1.msra.mxu0 %v864
    %1173 = vmatprep.subr.mxu0 %v867
    %1174 = vmatpush1.msra.mxu0 %v866
    %1175 = vmatprep.subr.mxu0 %v869
    %1176 = vmatpush1.msra.mxu0 %v868
    %1177 = vmatprep.subr.mxu0 %v871
    %1178 = vmatpush1.msra.mxu0 %v870
    %1179 = vmatprep.subr.mxu0 %v873
    %1180 = vmatpush1.msra.mxu0 %v872
    %1181 = vmatprep.subr.mxu0 %v875
    %1182 = vmatpush1.msra.mxu0 %v874
    %1183 = vmatprep.subr.mxu0 %v877
    %1184 = vmatpush1.msra.mxu0 %v876
    %1185 = vmatprep.subr.mxu0 0.0
    %1186 = vmatpush1.msra.mxu0 0.0
    %1187 = vmatprep.subr.mxu0 0.0
    %1188 = vmatpush1.msra.mxu0 0.0
    %1189 = vmatprep.subr.mxu0 0.0
    %1190 = vmatpush1.msra.mxu0 0.0
    %1191 = vmatprep.subr.mxu0 0.0
    %1192 = vmatpush1.msra.mxu0 0.0
    %1193 = vmatprep.subr.mxu0 0.0
    %1194 = vmatpush1.msra.mxu0 0.0
    %1195 = vmatprep.subr.mxu0 0.0
    %1196 = vmatpush1.msra.mxu0 0.0
    %1197 = vmatprep.subr.mxu0 0.0
    %1198 = vmatpush1.msra.mxu0 0.0
    %1199 = vmatprep.subr.mxu0 0.0
    %1200 = vmatpush1.msra.mxu0 0.0
    %1201 = vmatprep.subr.mxu0 0.0
    %1202 = vmatpush1.msra.mxu0 0.0
    %1203 = vmatprep.subr.mxu0 0.0
    %1204 = vmatpush1.msra.mxu0 0.0
    %1205 = vmatprep.subr.mxu0 0.0
    %1206 = vmatpush1.msra.mxu0 0.0
    %1207 = vmatprep.subr.mxu0 0.0
    %1208 = vmatpush1.msra.mxu0 0.0
    %1209 = vmatprep.subr.mxu0 0.0
    %1210 = vmatpush1.msra.mxu0 0.0
    %1211 = vmatprep.subr.mxu0 0.0
    %1212 = vmatpush1.msra.mxu0 0.0
    %1213 = vmatprep.subr.mxu0 0.0
    %1214 = vmatpush1.msra.mxu0 0.0
    %1215 = vmatprep.subr.mxu0 0.0
    %1216 = vmatpush1.msra.mxu0 0.0
    %1217 = vmatprep.mubr.f32.mxu0 0.0
    %1218 = vmatmul.mubr.f32.gmra.mrb[0].mxu0 %v640
    %v1219 = vpop.f32.mrb[0].mxu0
    %v1220 = vadd.f32 %v1131, %v1219
    %v1221 = vpop.f32.mrb[0].mxu0
    %v1222 = vadd.f32 %v1133, %v1221
    %1223 = vmatprep.mubr.f32.mxu0 0.0
    %1224 = vmatmul.mubr.f32.gmra.mrb[0].mxu0 %v641
    %v1225 = vpop.f32.mrb[0].mxu0
    %v1226 = vadd.f32 %v1137, %v1225
    %v1227 = vpop.f32.mrb[0].mxu0
    %v1228 = vadd.f32 %v1139, %v1227
    %1229 = vmatprep.mubr.f32.mxu0 0.0
    %1230 = vmatmul.mubr.f32.gmra.mrb[0].mxu0 %v642
    %v1231 = vpop.f32.mrb[0].mxu0
    %v1232 = vadd.f32 %v1143, %v1231
    %v1233 = vpop.f32.mrb[0].mxu0
    %v1234 = vadd.f32 %v1145, %v1233
    %1235 = vmatprep.mubr.f32.mxu0 0.0
    %1236 = vmatmul.mubr.f32.gmra.mrb[0].mxu0 %v643
    %v1237 = vpop.f32.mrb[0].mxu0
    %v1238 = vadd.f32 %v1149, %v1237
    %v1239 = vpop.f32.mrb[0].mxu0
    %v1240 = vadd.f32 %v1151, %v1239
    %1241 = vdwg.mxu0
    %v1242 = vld [vmem:[%s10] sm:$0x3]
    %v1243 = vld [vmem:[#allocation19] sm:$0x3]
    %s1244 = scalar_lea.vmem %s10, 2
    %v1245 = vld [vmem:[%s1244] sm:$0x3]
    %s1246 = scalar_lea.vmem [#allocation19], 2
    %v1247 = vld [vmem:[%s1246] sm:$0x3]
    %v1249 = vlaneseq
    %v1250 = vshrl.u32 %v1249, 7
    %v1251 = vsub.s32 0, %v1250
    %v1252 = vrot.slane %v1242, %v1251
    %v1253 = vlaneseq
    %v1254 = vshrl.u32 %v1253, 7
    %v1255 = vsub.s32 1, %v1254
    %v1256 = vrot.slane %v1242, %v1255
    %v1259 = vmul.f32 %v1252, %v1056
    %v1260 = vmul.f32 %v1256, %v1057
    %v1261 = vmul.f32 %v1252, %v1058
    %v1262 = vmul.f32 %v1256, %v1059
    %v1264 = vlaneseq
    %v1265 = vshrl.u32 %v1264, 7
    %v1266 = vsub.s32 0, %v1265
    %v1267 = vrot.slane %v1243, %v1266
    %v1268 = vlaneseq
    %v1269 = vshrl.u32 %v1268, 7
    %v1270 = vsub.s32 1, %v1269
    %v1271 = vrot.slane %v1243, %v1270
    %v1274 = vmul.f32 %v1267, %v1220
    %v1275 = vmul.f32 %v1271, %v1222
    %v1276 = vmul.f32 %v1267, %v1226
    %v1277 = vmul.f32 %v1271, %v1228
    %v1278 = vsub.f32 %v1259, %v1274
    %v1279 = vsub.f32 %v1260, %v1275
    %v1280 = vsub.f32 %v1261, %v1276
    %v1281 = vsub.f32 %v1262, %v1277
    %v1283 = vlaneseq
    %v1284 = vshrl.u32 %v1283, 7
    %v1285 = vsub.s32 0, %v1284
    %v1286 = vrot.slane %v1245, %v1285
    %v1287 = vlaneseq
    %v1288 = vshrl.u32 %v1287, 7
    %v1289 = vsub.s32 1, %v1288
    %v1290 = vrot.slane %v1245, %v1289
    %v1293 = vmul.f32 %v1286, %v1060
    %v1294 = vmul.f32 %v1290, %v1061
    %v1295 = vmul.f32 %v1286, %v1062
    %v1296 = vmul.f32 %v1290, %v1063
    %v1297 = vadd.f32 %v1278, %v1293
    %v1298 = vadd.f32 %v1279, %v1294
    %v1299 = vadd.f32 %v1280, %v1295
    %v1300 = vadd.f32 %v1281, %v1296
    %v1302 = vlaneseq
    %v1303 = vshrl.u32 %v1302, 7
    %v1304 = vsub.s32 0, %v1303
    %v1305 = vrot.slane %v1247, %v1304
    %v1306 = vlaneseq
    %v1307 = vshrl.u32 %v1306, 7
    %v1308 = vsub.s32 1, %v1307
    %v1309 = vrot.slane %v1247, %v1308
    %v1312 = vmul.f32 %v1305, %v1232
    %v1313 = vmul.f32 %v1309, %v1234
    %v1314 = vmul.f32 %v1305, %v1238
    %v1315 = vmul.f32 %v1309, %v1240
    %v1316 = vsub.f32 %v1297, %v1312
    %v1317 = vsub.f32 %v1298, %v1313
    %v1318 = vsub.f32 %v1299, %v1314
    %v1319 = vsub.f32 %v1300, %v1315
    %v1320 = vmul.f32 %v1252, %v1220
    %v1321 = vmul.f32 %v1256, %v1222
    %v1322 = vmul.f32 %v1252, %v1226
    %v1323 = vmul.f32 %v1256, %v1228
    %v1324 = vmul.f32 %v1267, %v1056
    %v1325 = vmul.f32 %v1271, %v1057
    %v1326 = vmul.f32 %v1267, %v1058
    %v1327 = vmul.f32 %v1271, %v1059
    %v1328 = vadd.f32 %v1320, %v1324
    %v1329 = vadd.f32 %v1321, %v1325
    %v1330 = vadd.f32 %v1322, %v1326
    %v1331 = vadd.f32 %v1323, %v1327
    %v1332 = vmul.f32 %v1286, %v1232
    %v1333 = vmul.f32 %v1290, %v1234
    %v1334 = vmul.f32 %v1286, %v1238
    %v1335 = vmul.f32 %v1290, %v1240
    %v1336 = vadd.f32 %v1328, %v1332
    %v1337 = vadd.f32 %v1329, %v1333
    %v1338 = vadd.f32 %v1330, %v1334
    %v1339 = vadd.f32 %v1331, %v1335
    %v1340 = vmul.f32 %v1305, %v1060
    %v1341 = vmul.f32 %v1309, %v1061
    %v1342 = vmul.f32 %v1305, %v1062
    %v1343 = vmul.f32 %v1309, %v1063
    %v1344 = vadd.f32 %v1336, %v1340
    %v1345 = vadd.f32 %v1337, %v1341
    %v1346 = vadd.f32 %v1338, %v1342
    %v1347 = vadd.f32 %v1339, %v1343
    %v1348 = vmul.f32 %v1316, %v1316
    %v1349 = vmul.f32 %v1317, %v1317
    %v1350 = vmul.f32 %v1318, %v1318
    %v1351 = vmul.f32 %v1319, %v1319
    %v1352 = vadd.f32 %v1348, 0.0
    %v1353 = vadd.f32 %v1349, 0.0
    %v1354 = vadd.f32 %v1350, 0.0
    %v1355 = vadd.f32 %v1351, 0.0
    %v1356 = vmul.f32 %v1344, %v1344
    %v1357 = vmul.f32 %v1345, %v1345
    %v1358 = vmul.f32 %v1346, %v1346
    %v1359 = vmul.f32 %v1347, %v1347
    %v1360 = vadd.f32 %v1352, %v1356
    %v1361 = vadd.f32 %v1353, %v1357
    %v1362 = vadd.f32 %v1354, %v1358
    %v1363 = vadd.f32 %v1355, %v1359
    %s1364 = scalar_lea.vmem %s10, 4
    %v1365 = vld [vmem:[%s1364] sm:$0x3]
    %s1366 = scalar_lea.vmem [#allocation19], 4
    %v1367 = vld [vmem:[%s1366] sm:$0x3]
    %s1368 = scalar_lea.vmem %s10, 6
    %v1369 = vld [vmem:[%s1368] sm:$0x3]
    %s1370 = scalar_lea.vmem [#allocation19], 6
    %v1371 = vld [vmem:[%s1370] sm:$0x3]
    %v1373 = vlaneseq
    %v1374 = vshrl.u32 %v1373, 7
    %v1375 = vsub.s32 0, %v1374
    %v1376 = vrot.slane %v1365, %v1375
    %v1377 = vlaneseq
    %v1378 = vshrl.u32 %v1377, 7
    %v1379 = vsub.s32 1, %v1378
    %v1380 = vrot.slane %v1365, %v1379
    %v1383 = vmul.f32 %v1376, %v1056
    %v1384 = vmul.f32 %v1380, %v1057
    %v1385 = vmul.f32 %v1376, %v1058
    %v1386 = vmul.f32 %v1380, %v1059
    %v1388 = vlaneseq
    %v1389 = vshrl.u32 %v1388, 7
    %v1390 = vsub.s32 0, %v1389
    %v1391 = vrot.slane %v1367, %v1390
    %v1392 = vlaneseq
    %v1393 = vshrl.u32 %v1392, 7
    %v1394 = vsub.s32 1, %v1393
    %v1395 = vrot.slane %v1367, %v1394
    %v1398 = vmul.f32 %v1391, %v1220
    %v1399 = vmul.f32 %v1395, %v1222
    %v1400 = vmul.f32 %v1391, %v1226
    %v1401 = vmul.f32 %v1395, %v1228
    %v1402 = vsub.f32 %v1383, %v1398
    %v1403 = vsub.f32 %v1384, %v1399
    %v1404 = vsub.f32 %v1385, %v1400
    %v1405 = vsub.f32 %v1386, %v1401
    %v1407 = vlaneseq
    %v1408 = vshrl.u32 %v1407, 7
    %v1409 = vsub.s32 0, %v1408
    %v1410 = vrot.slane %v1369, %v1409
    %v1411 = vlaneseq
    %v1412 = vshrl.u32 %v1411, 7
    %v1413 = vsub.s32 1, %v1412
    %v1414 = vrot.slane %v1369, %v1413
    %v1417 = vmul.f32 %v1410, %v1060
    %v1418 = vmul.f32 %v1414, %v1061
    %v1419 = vmul.f32 %v1410, %v1062
    %v1420 = vmul.f32 %v1414, %v1063
    %v1421 = vadd.f32 %v1402, %v1417
    %v1422 = vadd.f32 %v1403, %v1418
    %v1423 = vadd.f32 %v1404, %v1419
    %v1424 = vadd.f32 %v1405, %v1420
    %v1426 = vlaneseq
    %v1427 = vshrl.u32 %v1426, 7
    %v1428 = vsub.s32 0, %v1427
    %v1429 = vrot.slane %v1371, %v1428
    %v1430 = vlaneseq
    %v1431 = vshrl.u32 %v1430, 7
    %v1432 = vsub.s32 1, %v1431
    %v1433 = vrot.slane %v1371, %v1432
    %v1436 = vmul.f32 %v1429, %v1232
    %v1437 = vmul.f32 %v1433, %v1234
    %v1438 = vmul.f32 %v1429, %v1238
    %v1439 = vmul.f32 %v1433, %v1240
    %v1440 = vsub.f32 %v1421, %v1436
    %v1441 = vsub.f32 %v1422, %v1437
    %v1442 = vsub.f32 %v1423, %v1438
    %v1443 = vsub.f32 %v1424, %v1439
    %v1444 = vmul.f32 %v1376, %v1220
    %v1445 = vmul.f32 %v1380, %v1222
    %v1446 = vmul.f32 %v1376, %v1226
    %v1447 = vmul.f32 %v1380, %v1228
    %v1448 = vmul.f32 %v1391, %v1056
    %v1449 = vmul.f32 %v1395, %v1057
    %v1450 = vmul.f32 %v1391, %v1058
    %v1451 = vmul.f32 %v1395, %v1059
    %v1452 = vadd.f32 %v1444, %v1448
    %v1453 = vadd.f32 %v1445, %v1449
    %v1454 = vadd.f32 %v1446, %v1450
    %v1455 = vadd.f32 %v1447, %v1451
    %v1456 = vmul.f32 %v1410, %v1232
    %v1457 = vmul.f32 %v1414, %v1234
    %v1458 = vmul.f32 %v1410, %v1238
    %v1459 = vmul.f32 %v1414, %v1240
    %v1460 = vadd.f32 %v1452, %v1456
    %v1461 = vadd.f32 %v1453, %v1457
    %v1462 = vadd.f32 %v1454, %v1458
    %v1463 = vadd.f32 %v1455, %v1459
    %v1464 = vmul.f32 %v1429, %v1060
    %v1465 = vmul.f32 %v1433, %v1061
    %v1466 = vmul.f32 %v1429, %v1062
    %v1467 = vmul.f32 %v1433, %v1063
    %v1468 = vadd.f32 %v1460, %v1464
    %v1469 = vadd.f32 %v1461, %v1465
    %v1470 = vadd.f32 %v1462, %v1466
    %v1471 = vadd.f32 %v1463, %v1467
    %v1472 = vmul.f32 %v1440, %v1440
    %v1473 = vmul.f32 %v1441, %v1441
    %v1474 = vmul.f32 %v1442, %v1442
    %v1475 = vmul.f32 %v1443, %v1443
    %v1476 = vadd.f32 %v1360, %v1472
    %v1477 = vadd.f32 %v1361, %v1473
    %v1478 = vadd.f32 %v1362, %v1474
    %v1479 = vadd.f32 %v1363, %v1475
    %v1480 = vmul.f32 %v1468, %v1468
    %v1481 = vmul.f32 %v1469, %v1469
    %v1482 = vmul.f32 %v1470, %v1470
    %v1483 = vmul.f32 %v1471, %v1471
    %v1484 = vadd.f32 %v1476, %v1480
    %v1485 = vadd.f32 %v1477, %v1481
    %v1486 = vadd.f32 %v1478, %v1482
    %v1487 = vadd.f32 %v1479, %v1483
    %v1488 = vld [vmem:[%s12] sm:$0xff]
    %v1489 = vld [vmem:[%s12 + $0x8] sm:$0xff]
    %v1490 = vld [vmem:[%s12 + $0x10] sm:$0xff]
    %v1491 = vld [vmem:[%s12 + $0x18] sm:$0xff]
    %v1492 = vmul.f32 %v1488, %v1484
    %v1493 = vmul.f32 %v1489, %v1485
    %v1494 = vmul.f32 %v1490, %v1486
    %v1495 = vmul.f32 %v1491, %v1487
    %v1496 = vld [vmem:[#allocation20] sm:$0xff]
    %v1497 = vld [vmem:[#allocation20 + $0x8] sm:$0xff]
    %v1498 = vld [vmem:[#allocation20 + $0x10] sm:$0xff]
    %v1499 = vld [vmem:[#allocation20 + $0x18] sm:$0xff]
    %v1500 = vadd.f32 %v1492, %v1496
    %v1501 = vadd.f32 %v1493, %v1497
    %v1502 = vadd.f32 %v1494, %v1498
    %v1503 = vadd.f32 %v1495, %v1499
    %1504 = vst [vmem:[#allocation22] sm:$0xff] %v1500
    %1505 = vst [vmem:[#allocation22 + $0x8] sm:$0xff] %v1501
    %1506 = vst [vmem:[#allocation22 + $0x10] sm:$0xff] %v1502
    %1507 = vst [vmem:[#allocation22 + $0x18] sm:$0xff] %v1503
    // Predicated region
    $region106: #{tpu_custom_call.1} parent=1 // pred_check
      _
    $region107: #{tpu_custom_call.1} parent=1 // pred_check_branch
      %1509 = sbr.rel (0) target = $region109
    $region108: #{tpu_custom_call.1} parent=1 // pred_region
      %s1511 = ssub.s32 512, 512
      %1512 = vsyncadd [#allocation4], %s1511
      %s1513 = sshll.u32 [#allocation22], 4
      %s1514 = int_to_ptr.vmem [resolvable:$true] %s1513
      %1519 = dma.vmem_to_hbm [thread:$0]  %s1514, 512, %s14, [#allocation4], 256, 256, 16
    $region109: #{tpu_custom_call.1} parent=1 // pred_fallthru
      _
    // Predicated region
    $region110: #{tpu_custom_call.1} parent=1 // pred_check
      _
    $region111: #{tpu_custom_call.1} parent=1 // pred_check_branch
      %1521 = sbr.rel (0) target = $region113
    $region112: #{tpu_custom_call.1} parent=1 // pred_region
      %1522 = dma.done [#allocation4], 512
    $region113: #{tpu_custom_call.1} parent=1 // pred_fallthru
      _
    %1523 = vsyncpa [#allocation3], 1
    %1524 = vsyncpa [#allocation6], 1
    %1525 = vsyncpa [#allocation9], 1
    %1526 = vsyncpa [#allocation12], 1
    %1527 = vsyncpa [#allocation15], 1
    %1528 = vsyncpa [#allocation18], 1
    %1529 = vsyncpa [#allocation21], 1
    %1530 = vsyncpa [#allocation4], 1

</llo_original>
